<compile_context>
chip_gen: v5e
topology: v5e:2x2
jax: 0.10.0
libtpu: 0.0.40
codegen_flags: <defaults>
</compile_context>

<pallas_src>
import functools

import jax
import jax.numpy as jnp
from jax.experimental import pallas as pl
from jax.experimental.pallas import tpu as pltpu


def _make_kernel(num_linear, mxu_dtype):
    """Build a fused-MLP kernel for `num_linear` Linear layers."""

    def kernel(*refs):
        x_ref = refs[0]
        o_ref = refs[-1]
        wb = refs[1:-1]

        h = x_ref[...]
        if mxu_dtype is not None:
            h = h.astype(mxu_dtype)
        else:
            h = h.astype(jnp.float32)

        for li in range(num_linear):
            w = wb[2 * li][...]
            b = wb[2 * li + 1][...].astype(jnp.float32)
            # MXU matmul with f32 accumulation; bias-add / ReLU in f32 (VPU).
            h = jnp.dot(h, w, preferred_element_type=jnp.float32) + b
            if li < num_linear - 1:
                h = jnp.maximum(h, 0.0)
                if mxu_dtype is not None:
                    h = h.astype(mxu_dtype)

        o_ref[...] = h.astype(o_ref.dtype)

    return kernel


def spherical_harmonics_mlp(features, params, *, num_coefs, tile_b=256,
                            mxu_dtype=None):
    """features: [B, dim_x] -> SH coefficients [B, 3, num_coefs].

    params: list of (w, b) with w stored [in_dim, out_dim] (x @ W + b, i.e.
    PyTorch's Linear weight transposed). tile_b: batch tile per grid step
    (multiple of 8; sweep 128..2048). mxu_dtype: optional narrow dtype for MXU
    operands (e.g. jnp.bfloat16 on v6e/v7x).
    """
    B, dim_x = features.shape
    num_linear = len(params)
    out_dim = params[-1][0].shape[1]
    assert out_dim == 3 * num_coefs
    assert tile_b % 8 == 0

    # Lane-dense output: pad final layer's output dim up to a multiple of 128.
    out_pad = ((out_dim + 127) // 128) * 128
    # Lane-align the input feature dim (no-op for the module default 256).
    dim_x_pad = ((dim_x + 127) // 128) * 128
    # Pad batch to a multiple of tile_b instead of asserting divisibility.
    B_pad = ((B + tile_b - 1) // tile_b) * tile_b

    out_dtype = features.dtype
    op_dtype = mxu_dtype if mxu_dtype is not None else features.dtype

    x = features
    if B_pad != B or dim_x_pad != dim_x:
        x = jnp.pad(x, ((0, B_pad - B), (0, dim_x_pad - dim_x)))
    x = x.astype(op_dtype)

    args = [x]
    in_specs = [pl.BlockSpec((tile_b, dim_x_pad), lambda i: (i, 0))]
    flops = 0
    for li, (w, b) in enumerate(params):
        if li == 0 and dim_x_pad != dim_x:
            w = jnp.pad(w, ((0, dim_x_pad - dim_x), (0, 0)))
        if li == num_linear - 1 and out_pad != out_dim:
            w = jnp.pad(w, ((0, 0), (0, out_pad - out_dim)))
            b = jnp.pad(b, (0, out_pad - out_dim))
        w = w.astype(op_dtype)
        b2 = b.reshape(1, -1).astype(jnp.float32)
        args += [w, b2]
        # Full (untiled) weight / bias blocks with constant index_map: DMA'd
        # once, resident in VMEM across all grid steps.
        in_specs += [pl.BlockSpec(w.shape, lambda i: (0, 0)),
                     pl.BlockSpec(b2.shape, lambda i: (0, 0))]
        flops += 2 * B_pad * w.shape[0] * w.shape[1]

    out_specs = pl.BlockSpec((tile_b, out_pad), lambda i: (i, 0))
    out_shape = jax.ShapeDtypeStruct((B_pad, out_pad), out_dtype)

    # VMEM budget: double-buffered x/out tiles + params + f32 intermediates,
    # plus headroom; capped safely below v7x's 64 MiB physical VMEM.
    x_item = jnp.dtype(op_dtype).itemsize
    o_item = jnp.dtype(out_dtype).itemsize
    param_bytes = sum(int(a.size) * jnp.dtype(a.dtype).itemsize
                      for a in args[1:])
    tile_bytes = 2 * tile_b * (dim_x_pad * x_item + out_pad * o_item)
    widest = max([dim_x_pad, out_pad] + [wi.shape[1] for wi, _ in params])
    interm_bytes = 6 * tile_b * widest * 4
    vmem_limit = int(min(2 * param_bytes + tile_bytes + interm_bytes
                         + (8 << 20), 48 << 20))

    cost = pl.CostEstimate(
        flops=int(flops),
        transcendentals=0,
        bytes_accessed=int(B_pad * dim_x_pad * x_item
                           + B_pad * out_pad * o_item + param_bytes))

    out = pl.pallas_call(
        _make_kernel(num_linear, mxu_dtype),
        out_shape=out_shape,
        grid_spec=pltpu.PrefetchScalarGridSpec(
            num_scalar_prefetch=0,
            grid=(B_pad // tile_b,),
            in_specs=in_specs,
            out_specs=out_specs,
        ),
        compiler_params=pltpu.CompilerParams(
            dimension_semantics=("parallel",),
            vmem_limit_bytes=vmem_limit),
        cost_estimate=cost,
    )(*args)

    # Drop batch / lane padding, then .view(-1, 3, num_coefs).
    return out[:B, :out_dim].reshape(-1, 3, num_coefs)


def init_params(key, dim_x, dim_z, out_dim, num_layers):
    """Deterministic init matching create_mlp's Linear stack (synthetic)."""
    shapes = []
    in_dim = dim_x
    for _ in range(max(num_layers - 1, 1)):
        shapes.append((in_dim, dim_z))
        in_dim = dim_z
    shapes.append((in_dim, out_dim))

    params = []
    for shp in shapes:
        key, kw, kb = jax.random.split(key, 3)
        scale = 1.0 / float(jnp.sqrt(shp[0]))
        w = jax.random.uniform(kw, shp, jnp.float32, -scale, scale)
        b = jax.random.uniform(kb, (shp[1],), jnp.float32, -scale, scale)
        params.append((w, b))
    return params


def reference_mlp(features, params, num_coefs):
    h = features
    for i, (w, b) in enumerate(params):
        h = h @ w + b
        if i < len(params) - 1:
            h = jnp.maximum(h, 0.0)
    return h.reshape(-1, 3, num_coefs)


if __name__ == "__main__":
    # Module defaults: dim_x=256, dim_z=128, num_layers=8, lmax=2 -> 27 outputs.
    dim_x, dim_z, num_layers, lmax = 256, 128, 8, 2
    num_coefs = (lmax + 1) ** 2          # 9
    out_dim = 3 * num_coefs              # 27
    B = 300                              # non-multiple of tile_b: exercises padding

    key = jax.random.PRNGKey(0)
    key, kf = jax.random.split(key)
    features = jax.random.normal(kf, (B, dim_x), jnp.float32)
    params = init_params(key, dim_x, dim_z, out_dim, num_layers)

    ref = reference_mlp(features, params, num_coefs)

    # f32 path (exact check).
    run = jax.jit(functools.partial(
        spherical_harmonics_mlp, num_coefs=num_coefs, tile_b=256))
    sh = run(features, params)
    jax.block_until_ready(sh)
    assert sh.shape == (B, 3, num_coefs), sh.shape
    assert jnp.allclose(sh, ref, atol=1e-4, rtol=1e-4)

    # bf16 MXU-operand path (v6e/v7x traffic halving); loose check.
    run_bf16 = jax.jit(functools.partial(
        spherical_harmonics_mlp, num_coefs=num_coefs, tile_b=256,
        mxu_dtype=jnp.bfloat16))
    sh_bf16 = run_bf16(features, params)
    jax.block_until_ready(sh_bf16)
    rel = jnp.linalg.norm(sh_bf16 - ref) / (jnp.linalg.norm(ref) + 1e-12)
    assert rel < 0.1, float(rel)

    print("KERNEL_OK")
</pallas_src>

<mosaic_0001>
module attributes {stable_mosaic.version = 11 : i64} {
  func.func @kernel(%arg0: i32, %arg1: memref<256x256xf32, #tpu.memory_space<vmem>>, %arg2: memref<256x128xf32, #tpu.memory_space<vmem>>, %arg3: memref<1x128xf32, #tpu.memory_space<vmem>>, %arg4: memref<128x128xf32, #tpu.memory_space<vmem>>, %arg5: memref<1x128xf32, #tpu.memory_space<vmem>>, %arg6: memref<128x128xf32, #tpu.memory_space<vmem>>, %arg7: memref<1x128xf32, #tpu.memory_space<vmem>>, %arg8: memref<128x128xf32, #tpu.memory_space<vmem>>, %arg9: memref<1x128xf32, #tpu.memory_space<vmem>>, %arg10: memref<128x128xf32, #tpu.memory_space<vmem>>, %arg11: memref<1x128xf32, #tpu.memory_space<vmem>>, %arg12: memref<128x128xf32, #tpu.memory_space<vmem>>, %arg13: memref<1x128xf32, #tpu.memory_space<vmem>>, %arg14: memref<128x128xf32, #tpu.memory_space<vmem>>, %arg15: memref<1x128xf32, #tpu.memory_space<vmem>>, %arg16: memref<128x128xf32, #tpu.memory_space<vmem>>, %arg17: memref<1x128xf32, #tpu.memory_space<vmem>>, %arg18: memref<256x128xf32, #tpu.memory_space<vmem>>) attributes {dimension_semantics = [#tpu.dimension_semantics<parallel>], iteration_bounds = array<i64: 2>, scalar_prefetch = 0 : i64, scratch_operands = 0 : i64, tpu.core_type = #tpu.core_type<tc>, window_params = [{transform_indices = @transform_0, window_bounds = array<i64: 256, 256>}, {pipeline_mode = #tpu.pipeline_mode<synchronous>, transform_indices = @transform_1, window_bounds = array<i64: 256, 128>}, {pipeline_mode = #tpu.pipeline_mode<synchronous>, transform_indices = @transform_2, window_bounds = array<i64: 1, 128>}, {pipeline_mode = #tpu.pipeline_mode<synchronous>, transform_indices = @transform_3, window_bounds = array<i64: 128, 128>}, {pipeline_mode = #tpu.pipeline_mode<synchronous>, transform_indices = @transform_4, window_bounds = array<i64: 1, 128>}, {pipeline_mode = #tpu.pipeline_mode<synchronous>, transform_indices = @transform_5, window_bounds = array<i64: 128, 128>}, {pipeline_mode = #tpu.pipeline_mode<synchronous>, transform_indices = @transform_6, window_bounds = array<i64: 1, 128>}, {pipeline_mode = #tpu.pipeline_mode<synchronous>, transform_indices = @transform_7, window_bounds = array<i64: 128, 128>}, {pipeline_mode = #tpu.pipeline_mode<synchronous>, transform_indices = @transform_8, window_bounds = array<i64: 1, 128>}, {pipeline_mode = #tpu.pipeline_mode<synchronous>, transform_indices = @transform_9, window_bounds = array<i64: 128, 128>}, {pipeline_mode = #tpu.pipeline_mode<synchronous>, transform_indices = @transform_10, window_bounds = array<i64: 1, 128>}, {pipeline_mode = #tpu.pipeline_mode<synchronous>, transform_indices = @transform_11, window_bounds = array<i64: 128, 128>}, {pipeline_mode = #tpu.pipeline_mode<synchronous>, transform_indices = @transform_12, window_bounds = array<i64: 1, 128>}, {pipeline_mode = #tpu.pipeline_mode<synchronous>, transform_indices = @transform_13, window_bounds = array<i64: 128, 128>}, {pipeline_mode = #tpu.pipeline_mode<synchronous>, transform_indices = @transform_14, window_bounds = array<i64: 1, 128>}, {pipeline_mode = #tpu.pipeline_mode<synchronous>, transform_indices = @transform_15, window_bounds = array<i64: 128, 128>}, {pipeline_mode = #tpu.pipeline_mode<synchronous>, transform_indices = @transform_16, window_bounds = array<i64: 1, 128>}, {transform_indices = @transform_17, window_bounds = array<i64: 256, 128>}]} {
    %c0 = arith.constant 0 : index
    %c0_0 = arith.constant 0 : index
    %0 = vector.load %arg1[%c0, %c0_0] : memref<256x256xf32, #tpu.memory_space<vmem>>, vector<256x256xf32>
    %c0_1 = arith.constant 0 : index
    %c0_2 = arith.constant 0 : index
    %1 = vector.load %arg2[%c0_1, %c0_2] : memref<256x128xf32, #tpu.memory_space<vmem>>, vector<256x128xf32>
    %c0_3 = arith.constant 0 : index
    %c0_4 = arith.constant 0 : index
    %2 = vector.load %arg3[%c0_3, %c0_4] : memref<1x128xf32, #tpu.memory_space<vmem>>, vector<1x128xf32>
    %cst = arith.constant dense<0.000000e+00> : vector<256x128xf32>
    %3 = tpu.matmul %0, %1, %cst {dimension_numbers = #tpu.dot_dimension_numbers<[1], [0], [0], [1], [0, 0, 1, 1], [], []>} : vector<256x256xf32>, vector<256x128xf32>, vector<256x128xf32> -> vector<256x128xf32>
    %4 = vector.broadcast %2 : vector<1x128xf32> to vector<256x128xf32>
    %5 = arith.addf %3, %4 : vector<256x128xf32>
    %cst_5 = arith.constant 0.000000e+00 : f32
    %6 = vector.broadcast %cst_5 : f32 to vector<256x128xf32>
    %7 = arith.maximumf %5, %6 : vector<256x128xf32>
    %c0_6 = arith.constant 0 : index
    %c0_7 = arith.constant 0 : index
    %8 = vector.load %arg4[%c0_6, %c0_7] : memref<128x128xf32, #tpu.memory_space<vmem>>, vector<128x128xf32>
    %c0_8 = arith.constant 0 : index
    %c0_9 = arith.constant 0 : index
    %9 = vector.load %arg5[%c0_8, %c0_9] : memref<1x128xf32, #tpu.memory_space<vmem>>, vector<1x128xf32>
    %cst_10 = arith.constant dense<0.000000e+00> : vector<256x128xf32>
    %10 = tpu.matmul %7, %8, %cst_10 {dimension_numbers = #tpu.dot_dimension_numbers<[1], [0], [0], [1], [0, 0, 1, 1], [], []>} : vector<256x128xf32>, vector<128x128xf32>, vector<256x128xf32> -> vector<256x128xf32>
    %11 = vector.broadcast %9 : vector<1x128xf32> to vector<256x128xf32>
    %12 = arith.addf %10, %11 : vector<256x128xf32>
    %cst_11 = arith.constant 0.000000e+00 : f32
    %13 = vector.broadcast %cst_11 : f32 to vector<256x128xf32>
    %14 = arith.maximumf %12, %13 : vector<256x128xf32>
    %c0_12 = arith.constant 0 : index
    %c0_13 = arith.constant 0 : index
    %15 = vector.load %arg6[%c0_12, %c0_13] : memref<128x128xf32, #tpu.memory_space<vmem>>, vector<128x128xf32>
    %c0_14 = arith.constant 0 : index
    %c0_15 = arith.constant 0 : index
    %16 = vector.load %arg7[%c0_14, %c0_15] : memref<1x128xf32, #tpu.memory_space<vmem>>, vector<1x128xf32>
    %cst_16 = arith.constant dense<0.000000e+00> : vector<256x128xf32>
    %17 = tpu.matmul %14, %15, %cst_16 {dimension_numbers = #tpu.dot_dimension_numbers<[1], [0], [0], [1], [0, 0, 1, 1], [], []>} : vector<256x128xf32>, vector<128x128xf32>, vector<256x128xf32> -> vector<256x128xf32>
    %18 = vector.broadcast %16 : vector<1x128xf32> to vector<256x128xf32>
    %19 = arith.addf %17, %18 : vector<256x128xf32>
    %cst_17 = arith.constant 0.000000e+00 : f32
    %20 = vector.broadcast %cst_17 : f32 to vector<256x128xf32>
    %21 = arith.maximumf %19, %20 : vector<256x128xf32>
    %c0_18 = arith.constant 0 : index
    %c0_19 = arith.constant 0 : index
    %22 = vector.load %arg8[%c0_18, %c0_19] : memref<128x128xf32, #tpu.memory_space<vmem>>, vector<128x128xf32>
    %c0_20 = arith.constant 0 : index
    %c0_21 = arith.constant 0 : index
    %23 = vector.load %arg9[%c0_20, %c0_21] : memref<1x128xf32, #tpu.memory_space<vmem>>, vector<1x128xf32>
    %cst_22 = arith.constant dense<0.000000e+00> : vector<256x128xf32>
    %24 = tpu.matmul %21, %22, %cst_22 {dimension_numbers = #tpu.dot_dimension_numbers<[1], [0], [0], [1], [0, 0, 1, 1], [], []>} : vector<256x128xf32>, vector<128x128xf32>, vector<256x128xf32> -> vector<256x128xf32>
    %25 = vector.broadcast %23 : vector<1x128xf32> to vector<256x128xf32>
    %26 = arith.addf %24, %25 : vector<256x128xf32>
    %cst_23 = arith.constant 0.000000e+00 : f32
    %27 = vector.broadcast %cst_23 : f32 to vector<256x128xf32>
    %28 = arith.maximumf %26, %27 : vector<256x128xf32>
    %c0_24 = arith.constant 0 : index
    %c0_25 = arith.constant 0 : index
    %29 = vector.load %arg10[%c0_24, %c0_25] : memref<128x128xf32, #tpu.memory_space<vmem>>, vector<128x128xf32>
    %c0_26 = arith.constant 0 : index
    %c0_27 = arith.constant 0 : index
    %30 = vector.load %arg11[%c0_26, %c0_27] : memref<1x128xf32, #tpu.memory_space<vmem>>, vector<1x128xf32>
    %cst_28 = arith.constant dense<0.000000e+00> : vector<256x128xf32>
    %31 = tpu.matmul %28, %29, %cst_28 {dimension_numbers = #tpu.dot_dimension_numbers<[1], [0], [0], [1], [0, 0, 1, 1], [], []>} : vector<256x128xf32>, vector<128x128xf32>, vector<256x128xf32> -> vector<256x128xf32>
    %32 = vector.broadcast %30 : vector<1x128xf32> to vector<256x128xf32>
    %33 = arith.addf %31, %32 : vector<256x128xf32>
    %cst_29 = arith.constant 0.000000e+00 : f32
    %34 = vector.broadcast %cst_29 : f32 to vector<256x128xf32>
    %35 = arith.maximumf %33, %34 : vector<256x128xf32>
    %c0_30 = arith.constant 0 : index
    %c0_31 = arith.constant 0 : index
    %36 = vector.load %arg12[%c0_30, %c0_31] : memref<128x128xf32, #tpu.memory_space<vmem>>, vector<128x128xf32>
    %c0_32 = arith.constant 0 : index
    %c0_33 = arith.constant 0 : index
    %37 = vector.load %arg13[%c0_32, %c0_33] : memref<1x128xf32, #tpu.memory_space<vmem>>, vector<1x128xf32>
    %cst_34 = arith.constant dense<0.000000e+00> : vector<256x128xf32>
    %38 = tpu.matmul %35, %36, %cst_34 {dimension_numbers = #tpu.dot_dimension_numbers<[1], [0], [0], [1], [0, 0, 1, 1], [], []>} : vector<256x128xf32>, vector<128x128xf32>, vector<256x128xf32> -> vector<256x128xf32>
    %39 = vector.broadcast %37 : vector<1x128xf32> to vector<256x128xf32>
    %40 = arith.addf %38, %39 : vector<256x128xf32>
    %cst_35 = arith.constant 0.000000e+00 : f32
    %41 = vector.broadcast %cst_35 : f32 to vector<256x128xf32>
    %42 = arith.maximumf %40, %41 : vector<256x128xf32>
    %c0_36 = arith.constant 0 : index
    %c0_37 = arith.constant 0 : index
    %43 = vector.load %arg14[%c0_36, %c0_37] : memref<128x128xf32, #tpu.memory_space<vmem>>, vector<128x128xf32>
    %c0_38 = arith.constant 0 : index
    %c0_39 = arith.constant 0 : index
    %44 = vector.load %arg15[%c0_38, %c0_39] : memref<1x128xf32, #tpu.memory_space<vmem>>, vector<1x128xf32>
    %cst_40 = arith.constant dense<0.000000e+00> : vector<256x128xf32>
    %45 = tpu.matmul %42, %43, %cst_40 {dimension_numbers = #tpu.dot_dimension_numbers<[1], [0], [0], [1], [0, 0, 1, 1], [], []>} : vector<256x128xf32>, vector<128x128xf32>, vector<256x128xf32> -> vector<256x128xf32>
    %46 = vector.broadcast %44 : vector<1x128xf32> to vector<256x128xf32>
    %47 = arith.addf %45, %46 : vector<256x128xf32>
    %cst_41 = arith.constant 0.000000e+00 : f32
    %48 = vector.broadcast %cst_41 : f32 to vector<256x128xf32>
    %49 = arith.maximumf %47, %48 : vector<256x128xf32>
    %c0_42 = arith.constant 0 : index
    %c0_43 = arith.constant 0 : index
    %50 = vector.load %arg16[%c0_42, %c0_43] : memref<128x128xf32, #tpu.memory_space<vmem>>, vector<128x128xf32>
    %c0_44 = arith.constant 0 : index
    %c0_45 = arith.constant 0 : index
    %51 = vector.load %arg17[%c0_44, %c0_45] : memref<1x128xf32, #tpu.memory_space<vmem>>, vector<1x128xf32>
    %cst_46 = arith.constant dense<0.000000e+00> : vector<256x128xf32>
    %52 = tpu.matmul %49, %50, %cst_46 {dimension_numbers = #tpu.dot_dimension_numbers<[1], [0], [0], [1], [0, 0, 1, 1], [], []>} : vector<256x128xf32>, vector<128x128xf32>, vector<256x128xf32> -> vector<256x128xf32>
    %53 = vector.broadcast %51 : vector<1x128xf32> to vector<256x128xf32>
    %54 = arith.addf %52, %53 : vector<256x128xf32>
    %c0_47 = arith.constant 0 : index
    %c0_48 = arith.constant 0 : index
    %55 = vector.load %arg18[%c0_47, %c0_48] : memref<256x128xf32, #tpu.memory_space<vmem>>, vector<256x128xf32>
    tpu.vector_store %arg18[%c0_47, %c0_48], %54 {strides = array<i32>} : memref<256x128xf32, #tpu.memory_space<vmem>>, vector<256x128xf32>,
    return
  }
  func.func @transform_0(%arg0: i32) -> (i32, i32) {
    %c0_i32 = arith.constant 0 : i32
    %c0_i32_0 = arith.constant 0 : i32
    return %arg0, %c0_i32 : i32, i32
  }
  func.func @transform_1(%arg0: i32) -> (i32, i32) {
    %c0_i32 = arith.constant 0 : i32
    %c0_i32_0 = arith.constant 0 : i32
    %c0_i32_1 = arith.constant 0 : i32
    return %c0_i32, %c0_i32_0 : i32, i32
  }
  func.func @transform_2(%arg0: i32) -> (i32, i32) {
    %c0_i32 = arith.constant 0 : i32
    %c0_i32_0 = arith.constant 0 : i32
    %c0_i32_1 = arith.constant 0 : i32
    return %c0_i32, %c0_i32_0 : i32, i32
  }
  func.func @transform_3(%arg0: i32) -> (i32, i32) {
    %c0_i32 = arith.constant 0 : i32
    %c0_i32_0 = arith.constant 0 : i32
    %c0_i32_1 = arith.constant 0 : i32
    return %c0_i32, %c0_i32_0 : i32, i32
  }
  func.func @transform_4(%arg0: i32) -> (i32, i32) {
    %c0_i32 = arith.constant 0 : i32
    %c0_i32_0 = arith.constant 0 : i32
    %c0_i32_1 = arith.constant 0 : i32
    return %c0_i32, %c0_i32_0 : i32, i32
  }
  func.func @transform_5(%arg0: i32) -> (i32, i32) {
    %c0_i32 = arith.constant 0 : i32
    %c0_i32_0 = arith.constant 0 : i32
    %c0_i32_1 = arith.constant 0 : i32
    return %c0_i32, %c0_i32_0 : i32, i32
  }
  func.func @transform_6(%arg0: i32) -> (i32, i32) {
    %c0_i32 = arith.constant 0 : i32
    %c0_i32_0 = arith.constant 0 : i32
    %c0_i32_1 = arith.constant 0 : i32
    return %c0_i32, %c0_i32_0 : i32, i32
  }
  func.func @transform_7(%arg0: i32) -> (i32, i32) {
    %c0_i32 = arith.constant 0 : i32
    %c0_i32_0 = arith.constant 0 : i32
    %c0_i32_1 = arith.constant 0 : i32
    return %c0_i32, %c0_i32_0 : i32, i32
  }
  func.func @transform_8(%arg0: i32) -> (i32, i32) {
    %c0_i32 = arith.constant 0 : i32
    %c0_i32_0 = arith.constant 0 : i32
    %c0_i32_1 = arith.constant 0 : i32
    return %c0_i32, %c0_i32_0 : i32, i32
  }
  func.func @transform_9(%arg0: i32) -> (i32, i32) {
    %c0_i32 = arith.constant 0 : i32
    %c0_i32_0 = arith.constant 0 : i32
    %c0_i32_1 = arith.constant 0 : i32
    return %c0_i32, %c0_i32_0 : i32, i32
  }
  func.func @transform_10(%arg0: i32) -> (i32, i32) {
    %c0_i32 = arith.constant 0 : i32
    %c0_i32_0 = arith.constant 0 : i32
    %c0_i32_1 = arith.constant 0 : i32
    return %c0_i32, %c0_i32_0 : i32, i32
  }
  func.func @transform_11(%arg0: i32) -> (i32, i32) {
    %c0_i32 = arith.constant 0 : i32
    %c0_i32_0 = arith.constant 0 : i32
    %c0_i32_1 = arith.constant 0 : i32
    return %c0_i32, %c0_i32_0 : i32, i32
  }
  func.func @transform_12(%arg0: i32) -> (i32, i32) {
    %c0_i32 = arith.constant 0 : i32
    %c0_i32_0 = arith.constant 0 : i32
    %c0_i32_1 = arith.constant 0 : i32
    return %c0_i32, %c0_i32_0 : i32, i32
  }
  func.func @transform_13(%arg0: i32) -> (i32, i32) {
    %c0_i32 = arith.constant 0 : i32
    %c0_i32_0 = arith.constant 0 : i32
    %c0_i32_1 = arith.constant 0 : i32
    return %c0_i32, %c0_i32_0 : i32, i32
  }
  func.func @transform_14(%arg0: i32) -> (i32, i32) {
    %c0_i32 = arith.constant 0 : i32
    %c0_i32_0 = arith.constant 0 : i32
    %c0_i32_1 = arith.constant 0 : i32
    return %c0_i32, %c0_i32_0 : i32, i32
  }
  func.func @transform_15(%arg0: i32) -> (i32, i32) {
    %c0_i32 = arith.constant 0 : i32
    %c0_i32_0 = arith.constant 0 : i32
    %c0_i32_1 = arith.constant 0 : i32
    return %c0_i32, %c0_i32_0 : i32, i32
  }
  func.func @transform_16(%arg0: i32) -> (i32, i32) {
    %c0_i32 = arith.constant 0 : i32
    %c0_i32_0 = arith.constant 0 : i32
    %c0_i32_1 = arith.constant 0 : i32
    return %c0_i32, %c0_i32_0 : i32, i32
  }
  func.func @transform_17(%arg0: i32) -> (i32, i32) {
    %c0_i32 = arith.constant 0 : i32
    %c0_i32_0 = arith.constant 0 : i32
    return %arg0, %c0_i32 : i32, i32
  }
}

</mosaic_0001>

<llo_original>
// kernel: spherical_harmonics_mlp.1
$region0: #{spherical_harmonics_mlp.1}
  #allocation0 [shape = 'u32[]', space=smem, size = 0x4, offset = 0x4, fixed_abs, tag = 'smem constant byte address 0x4 - core index']
  #allocation1 [shape = 'u32[72,128]{1,0:T(1,128)}', space=vmem, size = 0x9000, scoped, tag = 'internal scratch']
  %s0 = inlined_call_operand.vmem [shape: f32[512,256], index: 0, kind: input, shape index: {}]
  %s1 = inlined_call_operand.vmem [shape: f32[256,128], index: 1, kind: input, shape index: {}]
  %s2 = inlined_call_operand.vmem [shape: f32[1,128], index: 2, kind: input, shape index: {}]
  %s3 = inlined_call_operand.vmem [shape: f32[128,128], index: 3, kind: input, shape index: {}]
  %s4 = inlined_call_operand.vmem [shape: f32[1,128], index: 4, kind: input, shape index: {}]
  %s5 = inlined_call_operand.vmem [shape: f32[128,128], index: 5, kind: input, shape index: {}]
  %s6 = inlined_call_operand.vmem [shape: f32[1,128], index: 6, kind: input, shape index: {}]
  %s7 = inlined_call_operand.vmem [shape: f32[128,128], index: 7, kind: input, shape index: {}]
  %s8 = inlined_call_operand.vmem [shape: f32[1,128], index: 8, kind: input, shape index: {}]
  %s9 = inlined_call_operand.vmem [shape: f32[128,128], index: 9, kind: input, shape index: {}]
  %s10 = inlined_call_operand.vmem [shape: f32[1,128], index: 10, kind: input, shape index: {}]
  %s11 = inlined_call_operand.vmem [shape: f32[128,128], index: 11, kind: input, shape index: {}]
  %s12 = inlined_call_operand.vmem [shape: f32[1,128], index: 12, kind: input, shape index: {}]
  %s13 = inlined_call_operand.vmem [shape: f32[128,128], index: 13, kind: input, shape index: {}]
  %s14 = inlined_call_operand.vmem [shape: f32[1,128], index: 14, kind: input, shape index: {}]
  %s15 = inlined_call_operand.vmem [shape: f32[128,128], index: 15, kind: input, shape index: {}]
  %s16 = inlined_call_operand.vmem [shape: f32[1,128], index: 16, kind: input, shape index: {}]
  %s17 = inlined_call_operand.vmem [shape: f32[512,128], index: 17, kind: output, shape index: {}]
  %s18 = sld [smem:[#allocation0]]
  $region101: #{spherical_harmonics_mlp.1} parent=0
    _
  %s20 = ssub.s32 1, %s18
  %s21 = scalar_select 0, %s20, %s18
  loop: start=0, step=1, limit=4
  $region2: #{spherical_harmonics_mlp.1} parent=0 // loop_pre_header
    _
  $region3: #{spherical_harmonics_mlp.1} parent=0 // loop_header
    %s23 = sphi 0, %s27
    %p24 = scmp.ge.s32.totalorder %s23, 4
    %s33 = sphi 0, %s35
    %s36 = sphi 0, %s33
    %s37 = sphi 0, %s36
    %s53 = sphi 0, %s37
    %s57 = sphi 0, %s57
    %s59 = sphi 0, %s57
    %s60 = sphi 0, %s59
    %s74 = sphi 0, %s60
    %s78 = sphi 0, %s78
    %s80 = sphi 0, %s78
    %s81 = sphi 0, %s80
    %s95 = sphi 0, %s81
    %s99 = sphi 0, %s99
    %s101 = sphi 0, %s99
    %s102 = sphi 0, %s101
    %s116 = sphi 0, %s102
    %s120 = sphi 0, %s120
    %s122 = sphi 0, %s120
    %s123 = sphi 0, %s122
    %s137 = sphi 0, %s123
    %s141 = sphi 0, %s141
    %s143 = sphi 0, %s141
    %s144 = sphi 0, %s143
    %s158 = sphi 0, %s144
    %s162 = sphi 0, %s162
    %s164 = sphi 0, %s162
    %s165 = sphi 0, %s164
    %s179 = sphi 0, %s165
    %s183 = sphi 0, %s183
    %s185 = sphi 0, %s183
    %s186 = sphi 0, %s185
    %s200 = sphi 0, %s186
    %s204 = sphi 0, %s204
    %s206 = sphi 0, %s204
    %s207 = sphi 0, %s206
    %s221 = sphi 0, %s207
    %s225 = sphi 0, %s225
    %s227 = sphi 0, %s225
    %s228 = sphi 0, %s227
    %s242 = sphi 0, %s228
    %s246 = sphi 0, %s246
    %s248 = sphi 0, %s246
    %s249 = sphi 0, %s248
    %s263 = sphi 0, %s249
    %s267 = sphi 0, %s267
    %s269 = sphi 0, %s267
    %s270 = sphi 0, %s269
    %s284 = sphi 0, %s270
    %s288 = sphi 0, %s288
    %s290 = sphi 0, %s288
    %s291 = sphi 0, %s290
    %s305 = sphi 0, %s291
    %s309 = sphi 0, %s309
    %s311 = sphi 0, %s309
    %s312 = sphi 0, %s311
    %s326 = sphi 0, %s312
    %s330 = sphi 0, %s330
    %s332 = sphi 0, %s330
    %s333 = sphi 0, %s332
    %s347 = sphi 0, %s333
    %s351 = sphi 0, %s351
    %s353 = sphi 0, %s351
    %s354 = sphi 0, %s353
    %s368 = sphi 0, %s354
    %s372 = sphi 0, %s372
    %s374 = sphi 0, %s372
    %s375 = sphi 0, %s374
    %s389 = sphi 0, %s375
    %s395 = sphi 0, %s397
    %s398 = sphi 0, %s395
    %s399 = sphi 0, %s398
    %s415 = sphi 0, %s399
  $region4: #{spherical_harmonics_mlp.1} parent=0 // loop_header_branch
    %26 = sbr.rel (%p24) target = $region8
  $region5: #{spherical_harmonics_mlp.1} parent=0 // loop_body
    %s28 = ssub.s32 %s23, 1
    %s29 = ssub.s32 %s23, 2
    %s30 = sadd.s32 %s23, 1
    %s31 = ssub.s32 %s23, %s30
    %p32 = scmp.eq.s32.totalorder %s31, 0
    %s34 = sadd.s32 %s33, 1
    %s35 = scalar_select %p32, %s33, %s34
    %p38 = pneg %p32
    %p39 = scmp.eq.s32.totalorder %s23, 1
    %p40 = por %p38, %p39
    %p41 = scmp.ne.s32.totalorder %s33, %s36
    %p42 = scmp.eq.s32.totalorder %s23, 0
    %p43 = por %p41, %p42
    %p44 = scmp.ne.s32.totalorder %s33, %s36
    %p45 = scmp.eq.s32.totalorder %s28, 1
    %p46 = por %p44, %p45
    %p47 = scmp.ne.s32.totalorder %s36, %s37
    %p48 = scmp.eq.s32.totalorder %s28, 0
    %p49 = por %p47, %p48
    %p50 = scmp.ne.s32.totalorder %s36, %s37
    %p51 = scmp.eq.s32.totalorder %s29, 1
    %p52 = por %p50, %p51
    %p54 = scmp.ne.s32.totalorder %s37, %s53
    %p55 = scmp.eq.s32.totalorder %s29, 0
    %p56 = por %p54, %p55
    %s58 = sadd.s32 %s57, 1
    %p61 = scmp.eq.s32.totalorder %s23, 1
    %p62 = scmp.ne.s32.totalorder %s57, %s59
    %p63 = scmp.eq.s32.totalorder %s23, 0
    %p64 = por %p62, %p63
    %p65 = scmp.ne.s32.totalorder %s57, %s59
    %p66 = scmp.eq.s32.totalorder %s28, 1
    %p67 = por %p65, %p66
    %p68 = scmp.ne.s32.totalorder %s59, %s60
    %p69 = scmp.eq.s32.totalorder %s28, 0
    %p70 = por %p68, %p69
    %p71 = scmp.ne.s32.totalorder %s59, %s60
    %p72 = scmp.eq.s32.totalorder %s29, 1
    %p73 = por %p71, %p72
    %p75 = scmp.ne.s32.totalorder %s60, %s74
    %p76 = scmp.eq.s32.totalorder %s29, 0
    %p77 = por %p75, %p76
    %s79 = sadd.s32 %s78, 1
    %p82 = scmp.eq.s32.totalorder %s23, 1
    %p83 = scmp.ne.s32.totalorder %s78, %s80
    %p84 = scmp.eq.s32.totalorder %s23, 0
    %p85 = por %p83, %p84
    %p86 = scmp.ne.s32.totalorder %s78, %s80
    %p87 = scmp.eq.s32.totalorder %s28, 1
    %p88 = por %p86, %p87
    %p89 = scmp.ne.s32.totalorder %s80, %s81
    %p90 = scmp.eq.s32.totalorder %s28, 0
    %p91 = por %p89, %p90
    %p92 = scmp.ne.s32.totalorder %s80, %s81
    %p93 = scmp.eq.s32.totalorder %s29, 1
    %p94 = por %p92, %p93
    %p96 = scmp.ne.s32.totalorder %s81, %s95
    %p97 = scmp.eq.s32.totalorder %s29, 0
    %p98 = por %p96, %p97
    %s100 = sadd.s32 %s99, 1
    %p103 = scmp.eq.s32.totalorder %s23, 1
    %p104 = scmp.ne.s32.totalorder %s99, %s101
    %p105 = scmp.eq.s32.totalorder %s23, 0
    %p106 = por %p104, %p105
    %p107 = scmp.ne.s32.totalorder %s99, %s101
    %p108 = scmp.eq.s32.totalorder %s28, 1
    %p109 = por %p107, %p108
    %p110 = scmp.ne.s32.totalorder %s101, %s102
    %p111 = scmp.eq.s32.totalorder %s28, 0
    %p112 = por %p110, %p111
    %p113 = scmp.ne.s32.totalorder %s101, %s102
    %p114 = scmp.eq.s32.totalorder %s29, 1
    %p115 = por %p113, %p114
    %p117 = scmp.ne.s32.totalorder %s102, %s116
    %p118 = scmp.eq.s32.totalorder %s29, 0
    %p119 = por %p117, %p118
    %s121 = sadd.s32 %s120, 1
    %p124 = scmp.eq.s32.totalorder %s23, 1
    %p125 = scmp.ne.s32.totalorder %s120, %s122
    %p126 = scmp.eq.s32.totalorder %s23, 0
    %p127 = por %p125, %p126
    %p128 = scmp.ne.s32.totalorder %s120, %s122
    %p129 = scmp.eq.s32.totalorder %s28, 1
    %p130 = por %p128, %p129
    %p131 = scmp.ne.s32.totalorder %s122, %s123
    %p132 = scmp.eq.s32.totalorder %s28, 0
    %p133 = por %p131, %p132
    %p134 = scmp.ne.s32.totalorder %s122, %s123
    %p135 = scmp.eq.s32.totalorder %s29, 1
    %p136 = por %p134, %p135
    %p138 = scmp.ne.s32.totalorder %s123, %s137
    %p139 = scmp.eq.s32.totalorder %s29, 0
    %p140 = por %p138, %p139
    %s142 = sadd.s32 %s141, 1
    %p145 = scmp.eq.s32.totalorder %s23, 1
    %p146 = scmp.ne.s32.totalorder %s141, %s143
    %p147 = scmp.eq.s32.totalorder %s23, 0
    %p148 = por %p146, %p147
    %p149 = scmp.ne.s32.totalorder %s141, %s143
    %p150 = scmp.eq.s32.totalorder %s28, 1
    %p151 = por %p149, %p150
    %p152 = scmp.ne.s32.totalorder %s143, %s144
    %p153 = scmp.eq.s32.totalorder %s28, 0
    %p154 = por %p152, %p153
    %p155 = scmp.ne.s32.totalorder %s143, %s144
    %p156 = scmp.eq.s32.totalorder %s29, 1
    %p157 = por %p155, %p156
    %p159 = scmp.ne.s32.totalorder %s144, %s158
    %p160 = scmp.eq.s32.totalorder %s29, 0
    %p161 = por %p159, %p160
    %s163 = sadd.s32 %s162, 1
    %p166 = scmp.eq.s32.totalorder %s23, 1
    %p167 = scmp.ne.s32.totalorder %s162, %s164
    %p168 = scmp.eq.s32.totalorder %s23, 0
    %p169 = por %p167, %p168
    %p170 = scmp.ne.s32.totalorder %s162, %s164
    %p171 = scmp.eq.s32.totalorder %s28, 1
    %p172 = por %p170, %p171
    %p173 = scmp.ne.s32.totalorder %s164, %s165
    %p174 = scmp.eq.s32.totalorder %s28, 0
    %p175 = por %p173, %p174
    %p176 = scmp.ne.s32.totalorder %s164, %s165
    %p177 = scmp.eq.s32.totalorder %s29, 1
    %p178 = por %p176, %p177
    %p180 = scmp.ne.s32.totalorder %s165, %s179
    %p181 = scmp.eq.s32.totalorder %s29, 0
    %p182 = por %p180, %p181
    %s184 = sadd.s32 %s183, 1
    %p187 = scmp.eq.s32.totalorder %s23, 1
    %p188 = scmp.ne.s32.totalorder %s183, %s185
    %p189 = scmp.eq.s32.totalorder %s23, 0
    %p190 = por %p188, %p189
    %p191 = scmp.ne.s32.totalorder %s183, %s185
    %p192 = scmp.eq.s32.totalorder %s28, 1
    %p193 = por %p191, %p192
    %p194 = scmp.ne.s32.totalorder %s185, %s186
    %p195 = scmp.eq.s32.totalorder %s28, 0
    %p196 = por %p194, %p195
    %p197 = scmp.ne.s32.totalorder %s185, %s186
    %p198 = scmp.eq.s32.totalorder %s29, 1
    %p199 = por %p197, %p198
    %p201 = scmp.ne.s32.totalorder %s186, %s200
    %p202 = scmp.eq.s32.totalorder %s29, 0
    %p203 = por %p201, %p202
    %s205 = sadd.s32 %s204, 1
    %p208 = scmp.eq.s32.totalorder %s23, 1
    %p209 = scmp.ne.s32.totalorder %s204, %s206
    %p210 = scmp.eq.s32.totalorder %s23, 0
    %p211 = por %p209, %p210
    %p212 = scmp.ne.s32.totalorder %s204, %s206
    %p213 = scmp.eq.s32.totalorder %s28, 1
    %p214 = por %p212, %p213
    %p215 = scmp.ne.s32.totalorder %s206, %s207
    %p216 = scmp.eq.s32.totalorder %s28, 0
    %p217 = por %p215, %p216
    %p218 = scmp.ne.s32.totalorder %s206, %s207
    %p219 = scmp.eq.s32.totalorder %s29, 1
    %p220 = por %p218, %p219
    %p222 = scmp.ne.s32.totalorder %s207, %s221
    %p223 = scmp.eq.s32.totalorder %s29, 0
    %p224 = por %p222, %p223
    %s226 = sadd.s32 %s225, 1
    %p229 = scmp.eq.s32.totalorder %s23, 1
    %p230 = scmp.ne.s32.totalorder %s225, %s227
    %p231 = scmp.eq.s32.totalorder %s23, 0
    %p232 = por %p230, %p231
    %p233 = scmp.ne.s32.totalorder %s225, %s227
    %p234 = scmp.eq.s32.totalorder %s28, 1
    %p235 = por %p233, %p234
    %p236 = scmp.ne.s32.totalorder %s227, %s228
    %p237 = scmp.eq.s32.totalorder %s28, 0
    %p238 = por %p236, %p237
    %p239 = scmp.ne.s32.totalorder %s227, %s228
    %p240 = scmp.eq.s32.totalorder %s29, 1
    %p241 = por %p239, %p240
    %p243 = scmp.ne.s32.totalorder %s228, %s242
    %p244 = scmp.eq.s32.totalorder %s29, 0
    %p245 = por %p243, %p244
    %s247 = sadd.s32 %s246, 1
    %p250 = scmp.eq.s32.totalorder %s23, 1
    %p251 = scmp.ne.s32.totalorder %s246, %s248
    %p252 = scmp.eq.s32.totalorder %s23, 0
    %p253 = por %p251, %p252
    %p254 = scmp.ne.s32.totalorder %s246, %s248
    %p255 = scmp.eq.s32.totalorder %s28, 1
    %p256 = por %p254, %p255
    %p257 = scmp.ne.s32.totalorder %s248, %s249
    %p258 = scmp.eq.s32.totalorder %s28, 0
    %p259 = por %p257, %p258
    %p260 = scmp.ne.s32.totalorder %s248, %s249
    %p261 = scmp.eq.s32.totalorder %s29, 1
    %p262 = por %p260, %p261
    %p264 = scmp.ne.s32.totalorder %s249, %s263
    %p265 = scmp.eq.s32.totalorder %s29, 0
    %p266 = por %p264, %p265
    %s268 = sadd.s32 %s267, 1
    %p271 = scmp.eq.s32.totalorder %s23, 1
    %p272 = scmp.ne.s32.totalorder %s267, %s269
    %p273 = scmp.eq.s32.totalorder %s23, 0
    %p274 = por %p272, %p273
    %p275 = scmp.ne.s32.totalorder %s267, %s269
    %p276 = scmp.eq.s32.totalorder %s28, 1
    %p277 = por %p275, %p276
    %p278 = scmp.ne.s32.totalorder %s269, %s270
    %p279 = scmp.eq.s32.totalorder %s28, 0
    %p280 = por %p278, %p279
    %p281 = scmp.ne.s32.totalorder %s269, %s270
    %p282 = scmp.eq.s32.totalorder %s29, 1
    %p283 = por %p281, %p282
    %p285 = scmp.ne.s32.totalorder %s270, %s284
    %p286 = scmp.eq.s32.totalorder %s29, 0
    %p287 = por %p285, %p286
    %s289 = sadd.s32 %s288, 1
    %p292 = scmp.eq.s32.totalorder %s23, 1
    %p293 = scmp.ne.s32.totalorder %s288, %s290
    %p294 = scmp.eq.s32.totalorder %s23, 0
    %p295 = por %p293, %p294
    %p296 = scmp.ne.s32.totalorder %s288, %s290
    %p297 = scmp.eq.s32.totalorder %s28, 1
    %p298 = por %p296, %p297
    %p299 = scmp.ne.s32.totalorder %s290, %s291
    %p300 = scmp.eq.s32.totalorder %s28, 0
    %p301 = por %p299, %p300
    %p302 = scmp.ne.s32.totalorder %s290, %s291
    %p303 = scmp.eq.s32.totalorder %s29, 1
    %p304 = por %p302, %p303
    %p306 = scmp.ne.s32.totalorder %s291, %s305
    %p307 = scmp.eq.s32.totalorder %s29, 0
    %p308 = por %p306, %p307
    %s310 = sadd.s32 %s309, 1
    %p313 = scmp.eq.s32.totalorder %s23, 1
    %p314 = scmp.ne.s32.totalorder %s309, %s311
    %p315 = scmp.eq.s32.totalorder %s23, 0
    %p316 = por %p314, %p315
    %p317 = scmp.ne.s32.totalorder %s309, %s311
    %p318 = scmp.eq.s32.totalorder %s28, 1
    %p319 = por %p317, %p318
    %p320 = scmp.ne.s32.totalorder %s311, %s312
    %p321 = scmp.eq.s32.totalorder %s28, 0
    %p322 = por %p320, %p321
    %p323 = scmp.ne.s32.totalorder %s311, %s312
    %p324 = scmp.eq.s32.totalorder %s29, 1
    %p325 = por %p323, %p324
    %p327 = scmp.ne.s32.totalorder %s312, %s326
    %p328 = scmp.eq.s32.totalorder %s29, 0
    %p329 = por %p327, %p328
    %s331 = sadd.s32 %s330, 1
    %p334 = scmp.eq.s32.totalorder %s23, 1
    %p335 = scmp.ne.s32.totalorder %s330, %s332
    %p336 = scmp.eq.s32.totalorder %s23, 0
    %p337 = por %p335, %p336
    %p338 = scmp.ne.s32.totalorder %s330, %s332
    %p339 = scmp.eq.s32.totalorder %s28, 1
    %p340 = por %p338, %p339
    %p341 = scmp.ne.s32.totalorder %s332, %s333
    %p342 = scmp.eq.s32.totalorder %s28, 0
    %p343 = por %p341, %p342
    %p344 = scmp.ne.s32.totalorder %s332, %s333
    %p345 = scmp.eq.s32.totalorder %s29, 1
    %p346 = por %p344, %p345
    %p348 = scmp.ne.s32.totalorder %s333, %s347
    %p349 = scmp.eq.s32.totalorder %s29, 0
    %p350 = por %p348, %p349
    %s352 = sadd.s32 %s351, 1
    %p355 = scmp.eq.s32.totalorder %s23, 1
    %p356 = scmp.ne.s32.totalorder %s351, %s353
    %p357 = scmp.eq.s32.totalorder %s23, 0
    %p358 = por %p356, %p357
    %p359 = scmp.ne.s32.totalorder %s351, %s353
    %p360 = scmp.eq.s32.totalorder %s28, 1
    %p361 = por %p359, %p360
    %p362 = scmp.ne.s32.totalorder %s353, %s354
    %p363 = scmp.eq.s32.totalorder %s28, 0
    %p364 = por %p362, %p363
    %p365 = scmp.ne.s32.totalorder %s353, %s354
    %p366 = scmp.eq.s32.totalorder %s29, 1
    %p367 = por %p365, %p366
    %p369 = scmp.ne.s32.totalorder %s354, %s368
    %p370 = scmp.eq.s32.totalorder %s29, 0
    %p371 = por %p369, %p370
    %s373 = sadd.s32 %s372, 1
    %p376 = scmp.eq.s32.totalorder %s23, 1
    %p377 = scmp.ne.s32.totalorder %s372, %s374
    %p378 = scmp.eq.s32.totalorder %s23, 0
    %p379 = por %p377, %p378
    %p380 = scmp.ne.s32.totalorder %s372, %s374
    %p381 = scmp.eq.s32.totalorder %s28, 1
    %p382 = por %p380, %p381
    %p383 = scmp.ne.s32.totalorder %s374, %s375
    %p384 = scmp.eq.s32.totalorder %s28, 0
    %p385 = por %p383, %p384
    %p386 = scmp.ne.s32.totalorder %s374, %s375
    %p387 = scmp.eq.s32.totalorder %s29, 1
    %p388 = por %p386, %p387
    %p390 = scmp.ne.s32.totalorder %s375, %s389
    %p391 = scmp.eq.s32.totalorder %s29, 0
    %p392 = por %p390, %p391
    %s393 = ssub.s32 %s23, %s30
    %p394 = scmp.eq.s32.totalorder %s393, 0
    %s396 = sadd.s32 %s395, 1
    %s397 = scalar_select %p394, %s395, %s396
    %p400 = pneg %p394
    %p401 = scmp.eq.s32.totalorder %s23, 1
    %p402 = por %p400, %p401
    %p403 = scmp.ne.s32.totalorder %s395, %s398
    %p404 = scmp.eq.s32.totalorder %s23, 0
    %p405 = por %p403, %p404
    %p406 = scmp.ne.s32.totalorder %s395, %s398
    %p407 = scmp.eq.s32.totalorder %s28, 1
    %p408 = por %p406, %p407
    %p409 = scmp.ne.s32.totalorder %s398, %s399
    %p410 = scmp.eq.s32.totalorder %s28, 0
    %p411 = por %p409, %p410
    %p412 = scmp.ne.s32.totalorder %s398, %s399
    %p413 = scmp.eq.s32.totalorder %s29, 1
    %p414 = por %p412, %p413
    %p416 = scmp.ne.s32.totalorder %s399, %s415
    %p417 = scmp.eq.s32.totalorder %s29, 0
    %p418 = por %p416, %p417
    %p419 = scmp.le.s32.totalorder 1, %s23
    %p420 = scmp.lt.s32.totalorder %s23, 3
    %p421 = pnand %p419, %p420
    %p422 = pneg %p421
    // Predicated region
    $region9: #{spherical_harmonics_mlp.1} parent=5 // pred_check
      _
    $region10: #{spherical_harmonics_mlp.1} parent=5 // pred_check_branch
      %424 = sbr.rel (%p421) target = $region12
    $region11: #{spherical_harmonics_mlp.1} parent=5 // pred_region
      %s425 = ssub.s32 %s23, 1
      // Predicated region
      $region13: #{spherical_harmonics_mlp.1} parent=11 // pred_check
        %p426 = pneg %p70
      $region14: #{spherical_harmonics_mlp.1} parent=11 // pred_check_branch
        %428 = sbr.rel (%p426) target = $region16
      $region15: #{spherical_harmonics_mlp.1} parent=11 // pred_region
        _
      $region16: #{spherical_harmonics_mlp.1} parent=11 // pred_fallthru
        _
      // Predicated region
      $region17: #{spherical_harmonics_mlp.1} parent=11 // pred_check
        %p429 = pneg %p91
      $region18: #{spherical_harmonics_mlp.1} parent=11 // pred_check_branch
        %431 = sbr.rel (%p429) target = $region20
      $region19: #{spherical_harmonics_mlp.1} parent=11 // pred_region
        _
      $region20: #{spherical_harmonics_mlp.1} parent=11 // pred_fallthru
        _
      // Predicated region
      $region21: #{spherical_harmonics_mlp.1} parent=11 // pred_check
        %p432 = pneg %p112
      $region22: #{spherical_harmonics_mlp.1} parent=11 // pred_check_branch
        %434 = sbr.rel (%p432) target = $region24
      $region23: #{spherical_harmonics_mlp.1} parent=11 // pred_region
        _
      $region24: #{spherical_harmonics_mlp.1} parent=11 // pred_fallthru
        _
      // Predicated region
      $region25: #{spherical_harmonics_mlp.1} parent=11 // pred_check
        %p435 = pneg %p133
      $region26: #{spherical_harmonics_mlp.1} parent=11 // pred_check_branch
        %437 = sbr.rel (%p435) target = $region28
      $region27: #{spherical_harmonics_mlp.1} parent=11 // pred_region
        _
      $region28: #{spherical_harmonics_mlp.1} parent=11 // pred_fallthru
        _
      // Predicated region
      $region29: #{spherical_harmonics_mlp.1} parent=11 // pred_check
        %p438 = pneg %p154
      $region30: #{spherical_harmonics_mlp.1} parent=11 // pred_check_branch
        %440 = sbr.rel (%p438) target = $region32
      $region31: #{spherical_harmonics_mlp.1} parent=11 // pred_region
        _
      $region32: #{spherical_harmonics_mlp.1} parent=11 // pred_fallthru
        _
      // Predicated region
      $region33: #{spherical_harmonics_mlp.1} parent=11 // pred_check
        %p441 = pneg %p175
      $region34: #{spherical_harmonics_mlp.1} parent=11 // pred_check_branch
        %443 = sbr.rel (%p441) target = $region36
      $region35: #{spherical_harmonics_mlp.1} parent=11 // pred_region
        _
      $region36: #{spherical_harmonics_mlp.1} parent=11 // pred_fallthru
        _
      // Predicated region
      $region37: #{spherical_harmonics_mlp.1} parent=11 // pred_check
        %p444 = pneg %p196
      $region38: #{spherical_harmonics_mlp.1} parent=11 // pred_check_branch
        %446 = sbr.rel (%p444) target = $region40
      $region39: #{spherical_harmonics_mlp.1} parent=11 // pred_region
        _
      $region40: #{spherical_harmonics_mlp.1} parent=11 // pred_fallthru
        _
      // Predicated region
      $region41: #{spherical_harmonics_mlp.1} parent=11 // pred_check
        %p447 = pneg %p217
      $region42: #{spherical_harmonics_mlp.1} parent=11 // pred_check_branch
        %449 = sbr.rel (%p447) target = $region44
      $region43: #{spherical_harmonics_mlp.1} parent=11 // pred_region
        _
      $region44: #{spherical_harmonics_mlp.1} parent=11 // pred_fallthru
        _
      // Predicated region
      $region45: #{spherical_harmonics_mlp.1} parent=11 // pred_check
        %p450 = pneg %p238
      $region46: #{spherical_harmonics_mlp.1} parent=11 // pred_check_branch
        %452 = sbr.rel (%p450) target = $region48
      $region47: #{spherical_harmonics_mlp.1} parent=11 // pred_region
        _
      $region48: #{spherical_harmonics_mlp.1} parent=11 // pred_fallthru
        _
      // Predicated region
      $region49: #{spherical_harmonics_mlp.1} parent=11 // pred_check
        %p453 = pneg %p259
      $region50: #{spherical_harmonics_mlp.1} parent=11 // pred_check_branch
        %455 = sbr.rel (%p453) target = $region52
      $region51: #{spherical_harmonics_mlp.1} parent=11 // pred_region
        _
      $region52: #{spherical_harmonics_mlp.1} parent=11 // pred_fallthru
        _
      // Predicated region
      $region53: #{spherical_harmonics_mlp.1} parent=11 // pred_check
        %p456 = pneg %p280
      $region54: #{spherical_harmonics_mlp.1} parent=11 // pred_check_branch
        %458 = sbr.rel (%p456) target = $region56
      $region55: #{spherical_harmonics_mlp.1} parent=11 // pred_region
        _
      $region56: #{spherical_harmonics_mlp.1} parent=11 // pred_fallthru
        _
      // Predicated region
      $region57: #{spherical_harmonics_mlp.1} parent=11 // pred_check
        %p459 = pneg %p301
      $region58: #{spherical_harmonics_mlp.1} parent=11 // pred_check_branch
        %461 = sbr.rel (%p459) target = $region60
      $region59: #{spherical_harmonics_mlp.1} parent=11 // pred_region
        _
      $region60: #{spherical_harmonics_mlp.1} parent=11 // pred_fallthru
        _
      // Predicated region
      $region61: #{spherical_harmonics_mlp.1} parent=11 // pred_check
        %p462 = pneg %p322
      $region62: #{spherical_harmonics_mlp.1} parent=11 // pred_check_branch
        %464 = sbr.rel (%p462) target = $region64
      $region63: #{spherical_harmonics_mlp.1} parent=11 // pred_region
        _
      $region64: #{spherical_harmonics_mlp.1} parent=11 // pred_fallthru
        _
      // Predicated region
      $region65: #{spherical_harmonics_mlp.1} parent=11 // pred_check
        %p465 = pneg %p343
      $region66: #{spherical_harmonics_mlp.1} parent=11 // pred_check_branch
        %467 = sbr.rel (%p465) target = $region68
      $region67: #{spherical_harmonics_mlp.1} parent=11 // pred_region
        _
      $region68: #{spherical_harmonics_mlp.1} parent=11 // pred_fallthru
        _
      // Predicated region
      $region69: #{spherical_harmonics_mlp.1} parent=11 // pred_check
        %p468 = pneg %p364
      $region70: #{spherical_harmonics_mlp.1} parent=11 // pred_check_branch
        %470 = sbr.rel (%p468) target = $region72
      $region71: #{spherical_harmonics_mlp.1} parent=11 // pred_region
        _
      $region72: #{spherical_harmonics_mlp.1} parent=11 // pred_fallthru
        _
      // Predicated region
      $region73: #{spherical_harmonics_mlp.1} parent=11 // pred_check
        %p471 = pneg %p385
      $region74: #{spherical_harmonics_mlp.1} parent=11 // pred_check_branch
        %473 = sbr.rel (%p471) target = $region76
      $region75: #{spherical_harmonics_mlp.1} parent=11 // pred_region
        _
      $region76: #{spherical_harmonics_mlp.1} parent=11 // pred_fallthru
        _
    $region12: #{spherical_harmonics_mlp.1} parent=5 // pred_fallthru
      _
    %p474 = scmp.lt.s32.totalorder %s23, 2
    // Predicated region
    $region77: #{spherical_harmonics_mlp.1} parent=5 // pred_check
      %p475 = pneg %p474
    $region78: #{spherical_harmonics_mlp.1} parent=5 // pred_check_branch
      %477 = sbr.rel (%p475) target = $region80
    $region79: #{spherical_harmonics_mlp.1} parent=5 // pred_region
      // Predicated region
      $region81: #{spherical_harmonics_mlp.1} parent=79 // pred_check
        %p478 = pneg %p43
      $region82: #{spherical_harmonics_mlp.1} parent=79 // pred_check_branch
        %480 = sbr.rel (%p478) target = $region84
      $region83: #{spherical_harmonics_mlp.1} parent=79 // pred_region
        %s481 = smul.u32 32, %s23
        %p482 = scmp.lt.s32.totalorder %s481, 63
        %s483 = scalar_select %p482, %s481, 63
        %s484 = smul.addr %s483, 2
        %s485 = smul.addr %s484, 8
        %s486 = scalar_lea.vmem %s0, %s485
        %s487 = smul.u32 32, %s23
      $region84: #{spherical_harmonics_mlp.1} parent=79 // pred_fallthru
        _
    $region80: #{spherical_harmonics_mlp.1} parent=5 // pred_fallthru
      _
    %p488 = scmp.le.s32.totalorder 1, %s23
    %p489 = scmp.lt.s32.totalorder %s23, 3
    %p490 = pnand %p488, %p489
    %p491 = pneg %p490
    // Predicated region
    $region85: #{spherical_harmonics_mlp.1} parent=5 // pred_check
      _
    $region86: #{spherical_harmonics_mlp.1} parent=5 // pred_check_branch
      %493 = sbr.rel (%p490) target = $region88
    $region87: #{spherical_harmonics_mlp.1} parent=5 // pred_region
      %s494 = ssub.s32 %s23, 1
      %s495 = smul.u32 32, %s28
      %p496 = scmp.lt.s32.totalorder %s495, 63
      %s497 = scalar_select %p496, %s495, 63
      %s498 = smul.addr %s497, 2
      %s499 = smul.addr %s498, 8
      %s500 = scalar_lea.vmem %s0, %s499
      %p501 = pneg %p49
      %p502 = pneg %p46
      %p503 = pneg %p70
      %p504 = pneg %p67
      %p505 = pneg %p91
      %p506 = pneg %p88
      %p507 = pneg %p112
      %p508 = pneg %p109
      %p509 = pneg %p133
      %p510 = pneg %p130
      %p511 = pneg %p154
      %p512 = pneg %p151
      %p513 = pneg %p175
      %p514 = pneg %p172
      %p515 = pneg %p196
      %p516 = pneg %p193
      %p517 = pneg %p217
      %p518 = pneg %p214
      %p519 = pneg %p238
      %p520 = pneg %p235
      %p521 = pneg %p259
      %p522 = pneg %p256
      %p523 = pneg %p280
      %p524 = pneg %p277
      %p525 = pneg %p301
      %p526 = pneg %p298
      %p527 = pneg %p322
      %p528 = pneg %p319
      %p529 = pneg %p343
      %p530 = pneg %p340
      %p531 = pneg %p364
      %p532 = pneg %p361
      %p533 = pneg %p385
      %p534 = pneg %p382
      %p535 = pneg %p411
      %p536 = pneg %p408
      %s537 = smul.u32 32, %s28
      %p538 = scmp.lt.s32.totalorder %s537, 63
      %s539 = scalar_select %p538, %s537, 63
      %s540 = smul.addr %s539, 8
      %s541 = scalar_lea.vmem %s17, %s540
      %s542 = smul.u32 32, %s28
      %p543 = scmp.lt.s32.totalorder %s542, 63
      %s544 = scalar_select %p543, %s542, 63
      %s545 = smul.addr %s544, 2
      %s546 = smul.addr %s545, 8
      %s547 = scalar_lea.vmem %s0, %s546
      %s548 = smul.u32 32, %s28
      %s549 = smul.u32 32, %s28
      %p550 = scmp.lt.s32.totalorder %s549, 63
      %s551 = scalar_select %p550, %s549, 63
      %s552 = smul.addr %s551, 8
      %s553 = scalar_lea.vmem %s17, %s552
      %s554 = smul.u32 32, %s28
      %v555 = vld [vmem:[%s547] sm:$0xff]
      %v556 = vld [vmem:[%s547 + $0x8] sm:$0xff]
      %v557 = vld [vmem:[%s547 + $0x10] sm:$0xff]
      %v558 = vld [vmem:[%s547 + $0x18] sm:$0xff]
      %v559 = vld [vmem:[%s547 + $0x20] sm:$0xff]
      %v560 = vld [vmem:[%s547 + $0x28] sm:$0xff]
      %v561 = vld [vmem:[%s547 + $0x30] sm:$0xff]
      %v562 = vld [vmem:[%s547 + $0x38] sm:$0xff]
      %v563 = vld [vmem:[%s547 + $0x40] sm:$0xff]
      %v564 = vld [vmem:[%s547 + $0x48] sm:$0xff]
      %v565 = vld [vmem:[%s547 + $0x50] sm:$0xff]
      %v566 = vld [vmem:[%s547 + $0x58] sm:$0xff]
      %v567 = vld [vmem:[%s547 + $0x60] sm:$0xff]
      %v568 = vld [vmem:[%s547 + $0x68] sm:$0xff]
      %v569 = vld [vmem:[%s547 + $0x70] sm:$0xff]
      %v570 = vld [vmem:[%s547 + $0x78] sm:$0xff]
      %v571 = vld [vmem:[%s547 + $0x80] sm:$0xff]
      %v572 = vld [vmem:[%s547 + $0x88] sm:$0xff]
      %v573 = vld [vmem:[%s547 + $0x90] sm:$0xff]
      %v574 = vld [vmem:[%s547 + $0x98] sm:$0xff]
      %v575 = vld [vmem:[%s547 + $0xa0] sm:$0xff]
      %v576 = vld [vmem:[%s547 + $0xa8] sm:$0xff]
      %v577 = vld [vmem:[%s547 + $0xb0] sm:$0xff]
      %v578 = vld [vmem:[%s547 + $0xb8] sm:$0xff]
      %v579 = vld [vmem:[%s547 + $0xc0] sm:$0xff]
      %v580 = vld [vmem:[%s547 + $0xc8] sm:$0xff]
      %v581 = vld [vmem:[%s547 + $0xd0] sm:$0xff]
      %v582 = vld [vmem:[%s547 + $0xd8] sm:$0xff]
      %v583 = vld [vmem:[%s547 + $0xe0] sm:$0xff]
      %v584 = vld [vmem:[%s547 + $0xe8] sm:$0xff]
      %v585 = vld [vmem:[%s547 + $0xf0] sm:$0xff]
      %v586 = vld [vmem:[%s547 + $0xf8] sm:$0xff]
      %v587 = vld [vmem:[%s547 + $0x100] sm:$0xff]
      %v588 = vld [vmem:[%s547 + $0x108] sm:$0xff]
      %v589 = vld [vmem:[%s547 + $0x110] sm:$0xff]
      %v590 = vld [vmem:[%s547 + $0x118] sm:$0xff]
      %v591 = vld [vmem:[%s547 + $0x120] sm:$0xff]
      %v592 = vld [vmem:[%s547 + $0x128] sm:$0xff]
      %v593 = vld [vmem:[%s547 + $0x130] sm:$0xff]
      %v594 = vld [vmem:[%s547 + $0x138] sm:$0xff]
      %v595 = vld [vmem:[%s547 + $0x140] sm:$0xff]
      %v596 = vld [vmem:[%s547 + $0x148] sm:$0xff]
      %v597 = vld [vmem:[%s547 + $0x150] sm:$0xff]
      %v598 = vld [vmem:[%s547 + $0x158] sm:$0xff]
      %v599 = vld [vmem:[%s547 + $0x160] sm:$0xff]
      %v600 = vld [vmem:[%s547 + $0x168] sm:$0xff]
      %v601 = vld [vmem:[%s547 + $0x170] sm:$0xff]
      %v602 = vld [vmem:[%s547 + $0x178] sm:$0xff]
      %v603 = vld [vmem:[%s547 + $0x180] sm:$0xff]
      %v604 = vld [vmem:[%s547 + $0x188] sm:$0xff]
      %v605 = vld [vmem:[%s547 + $0x190] sm:$0xff]
      %v606 = vld [vmem:[%s547 + $0x198] sm:$0xff]
      %v607 = vld [vmem:[%s547 + $0x1a0] sm:$0xff]
      %v608 = vld [vmem:[%s547 + $0x1a8] sm:$0xff]
      %v609 = vld [vmem:[%s547 + $0x1b0] sm:$0xff]
      %v610 = vld [vmem:[%s547 + $0x1b8] sm:$0xff]
      %v611 = vld [vmem:[%s547 + $0x1c0] sm:$0xff]
      %v612 = vld [vmem:[%s547 + $0x1c8] sm:$0xff]
      %v613 = vld [vmem:[%s547 + $0x1d0] sm:$0xff]
      %v614 = vld [vmem:[%s547 + $0x1d8] sm:$0xff]
      %v615 = vld [vmem:[%s547 + $0x1e0] sm:$0xff]
      %v616 = vld [vmem:[%s547 + $0x1e8] sm:$0xff]
      %v617 = vld [vmem:[%s547 + $0x1f0] sm:$0xff]
      %v618 = vld [vmem:[%s547 + $0x1f8] sm:$0xff]
      %v619 = vld [vmem:[%s1] sm:$0xff]
      %v620 = vld [vmem:[%s1 + $0x8] sm:$0xff]
      %v621 = vld [vmem:[%s1 + $0x10] sm:$0xff]
      %v622 = vld [vmem:[%s1 + $0x18] sm:$0xff]
      %v623 = vld [vmem:[%s1 + $0x20] sm:$0xff]
      %v624 = vld [vmem:[%s1 + $0x28] sm:$0xff]
      %v625 = vld [vmem:[%s1 + $0x30] sm:$0xff]
      %v626 = vld [vmem:[%s1 + $0x38] sm:$0xff]
      %v627 = vld [vmem:[%s1 + $0x40] sm:$0xff]
      %v628 = vld [vmem:[%s1 + $0x48] sm:$0xff]
      %v629 = vld [vmem:[%s1 + $0x50] sm:$0xff]
      %v630 = vld [vmem:[%s1 + $0x58] sm:$0xff]
      %v631 = vld [vmem:[%s1 + $0x60] sm:$0xff]
      %v632 = vld [vmem:[%s1 + $0x68] sm:$0xff]
      %v633 = vld [vmem:[%s1 + $0x70] sm:$0xff]
      %v634 = vld [vmem:[%s1 + $0x78] sm:$0xff]
      %v635 = vld [vmem:[%s1 + $0x80] sm:$0xff]
      %v636 = vld [vmem:[%s1 + $0x88] sm:$0xff]
      %v637 = vld [vmem:[%s1 + $0x90] sm:$0xff]
      %v638 = vld [vmem:[%s1 + $0x98] sm:$0xff]
      %v639 = vld [vmem:[%s1 + $0xa0] sm:$0xff]
      %v640 = vld [vmem:[%s1 + $0xa8] sm:$0xff]
      %v641 = vld [vmem:[%s1 + $0xb0] sm:$0xff]
      %v642 = vld [vmem:[%s1 + $0xb8] sm:$0xff]
      %v643 = vld [vmem:[%s1 + $0xc0] sm:$0xff]
      %v644 = vld [vmem:[%s1 + $0xc8] sm:$0xff]
      %v645 = vld [vmem:[%s1 + $0xd0] sm:$0xff]
      %v646 = vld [vmem:[%s1 + $0xd8] sm:$0xff]
      %v647 = vld [vmem:[%s1 + $0xe0] sm:$0xff]
      %v648 = vld [vmem:[%s1 + $0xe8] sm:$0xff]
      %v649 = vld [vmem:[%s1 + $0xf0] sm:$0xff]
      %v650 = vld [vmem:[%s1 + $0xf8] sm:$0xff]
      %v651 = vld [vmem:[%s2] sm:$0x1]
      %v653 = vperm.slane %v651, 0
      %655 = vmatpush.msra.mxu0 %v634
      %656 = vmatpush.msra.mxu0 %v633
      %657 = vmatpush.msra.mxu0 %v632
      %658 = vmatpush.msra.mxu0 %v631
      %659 = vmatpush.msra.mxu0 %v630
      %660 = vmatpush.msra.mxu0 %v629
      %661 = vmatpush.msra.mxu0 %v628
      %662 = vmatpush.msra.mxu0 %v627
      %663 = vmatpush.msra.mxu0 %v626
      %664 = vmatpush.msra.mxu0 %v625
      %665 = vmatpush.msra.mxu0 %v624
      %666 = vmatpush.msra.mxu0 %v623
      %667 = vmatpush.msra.mxu0 %v622
      %668 = vmatpush.msra.mxu0 %v621
      %669 = vmatpush.msra.mxu0 %v620
      %670 = vmatpush.msra.mxu0 %v619
      %671 = vmatmul.f32.gmra.mxu0 %v555
      %v672 = vpop.f32.mrf.mxu0
      %v673 = vadd.f32 %v653, %v672
      %674 = vmatmul.f32.gmra.mxu0 %v557
      %v675 = vpop.f32.mrf.mxu0
      %v676 = vadd.f32 %v653, %v675
      %677 = vmatmul.f32.gmra.mxu0 %v559
      %v678 = vpop.f32.mrf.mxu0
      %v679 = vadd.f32 %v653, %v678
      %680 = vmatmul.f32.gmra.mxu0 %v561
      %v681 = vpop.f32.mrf.mxu0
      %v682 = vadd.f32 %v653, %v681
      %683 = vmatmul.f32.gmra.mxu0 %v563
      %v684 = vpop.f32.mrf.mxu0
      %v685 = vadd.f32 %v653, %v684
      %686 = vmatmul.f32.gmra.mxu0 %v565
      %v687 = vpop.f32.mrf.mxu0
      %v688 = vadd.f32 %v653, %v687
      %689 = vmatmul.f32.gmra.mxu0 %v567
      %v690 = vpop.f32.mrf.mxu0
      %v691 = vadd.f32 %v653, %v690
      %692 = vmatmul.f32.gmra.mxu0 %v569
      %v693 = vpop.f32.mrf.mxu0
      %v694 = vadd.f32 %v653, %v693
      %695 = vmatmul.f32.gmra.mxu0 %v571
      %v696 = vpop.f32.mrf.mxu0
      %v697 = vadd.f32 %v653, %v696
      %698 = vmatmul.f32.gmra.mxu0 %v573
      %v699 = vpop.f32.mrf.mxu0
      %v700 = vadd.f32 %v653, %v699
      %701 = vmatmul.f32.gmra.mxu0 %v575
      %v702 = vpop.f32.mrf.mxu0
      %v703 = vadd.f32 %v653, %v702
      %704 = vmatmul.f32.gmra.mxu0 %v577
      %v705 = vpop.f32.mrf.mxu0
      %v706 = vadd.f32 %v653, %v705
      %707 = vmatmul.f32.gmra.mxu0 %v579
      %v708 = vpop.f32.mrf.mxu0
      %v709 = vadd.f32 %v653, %v708
      %710 = vmatmul.f32.gmra.mxu0 %v581
      %v711 = vpop.f32.mrf.mxu0
      %v712 = vadd.f32 %v653, %v711
      %713 = vmatmul.f32.gmra.mxu0 %v583
      %v714 = vpop.f32.mrf.mxu0
      %v715 = vadd.f32 %v653, %v714
      %716 = vmatmul.f32.gmra.mxu0 %v585
      %v717 = vpop.f32.mrf.mxu0
      %v718 = vadd.f32 %v653, %v717
      %719 = vmatmul.f32.gmra.mxu0 %v587
      %v720 = vpop.f32.mrf.mxu0
      %v721 = vadd.f32 %v653, %v720
      %722 = vmatmul.f32.gmra.mxu0 %v589
      %v723 = vpop.f32.mrf.mxu0
      %v724 = vadd.f32 %v653, %v723
      %725 = vmatmul.f32.gmra.mxu0 %v591
      %v726 = vpop.f32.mrf.mxu0
      %v727 = vadd.f32 %v653, %v726
      %728 = vmatmul.f32.gmra.mxu0 %v593
      %v729 = vpop.f32.mrf.mxu0
      %v730 = vadd.f32 %v653, %v729
      %731 = vmatmul.f32.gmra.mxu0 %v595
      %v732 = vpop.f32.mrf.mxu0
      %v733 = vadd.f32 %v653, %v732
      %734 = vmatmul.f32.gmra.mxu0 %v597
      %v735 = vpop.f32.mrf.mxu0
      %v736 = vadd.f32 %v653, %v735
      %737 = vmatmul.f32.gmra.mxu0 %v599
      %v738 = vpop.f32.mrf.mxu0
      %v739 = vadd.f32 %v653, %v738
      %740 = vmatmul.f32.gmra.mxu0 %v601
      %v741 = vpop.f32.mrf.mxu0
      %v742 = vadd.f32 %v653, %v741
      %743 = vmatmul.f32.gmra.mxu0 %v603
      %v744 = vpop.f32.mrf.mxu0
      %v745 = vadd.f32 %v653, %v744
      %746 = vmatmul.f32.gmra.mxu0 %v605
      %v747 = vpop.f32.mrf.mxu0
      %v748 = vadd.f32 %v653, %v747
      %749 = vmatmul.f32.gmra.mxu0 %v607
      %v750 = vpop.f32.mrf.mxu0
      %v751 = vadd.f32 %v653, %v750
      %752 = vmatmul.f32.gmra.mxu0 %v609
      %v753 = vpop.f32.mrf.mxu0
      %v754 = vadd.f32 %v653, %v753
      %755 = vmatmul.f32.gmra.mxu0 %v611
      %v756 = vpop.f32.mrf.mxu0
      %v757 = vadd.f32 %v653, %v756
      %758 = vmatmul.f32.gmra.mxu0 %v613
      %v759 = vpop.f32.mrf.mxu0
      %v760 = vadd.f32 %v653, %v759
      %761 = vmatmul.f32.gmra.mxu0 %v615
      %v762 = vpop.f32.mrf.mxu0
      %v763 = vadd.f32 %v653, %v762
      %764 = vmatmul.f32.gmra.mxu0 %v617
      %v765 = vpop.f32.mrf.mxu0
      %v766 = vadd.f32 %v653, %v765
      %767 = vdwg.mxu0
      %768 = vmatpush.msra.mxu0 %v650
      %769 = vmatpush.msra.mxu0 %v649
      %770 = vmatpush.msra.mxu0 %v648
      %771 = vmatpush.msra.mxu0 %v647
      %772 = vmatpush.msra.mxu0 %v646
      %773 = vmatpush.msra.mxu0 %v645
      %774 = vmatpush.msra.mxu0 %v644
      %775 = vmatpush.msra.mxu0 %v643
      %776 = vmatpush.msra.mxu0 %v642
      %777 = vmatpush.msra.mxu0 %v641
      %778 = vmatpush.msra.mxu0 %v640
      %779 = vmatpush.msra.mxu0 %v639
      %780 = vmatpush.msra.mxu0 %v638
      %781 = vmatpush.msra.mxu0 %v637
      %782 = vmatpush.msra.mxu0 %v636
      %783 = vmatpush.msra.mxu0 %v635
      %784 = vmatmul.f32.gmra.mxu0 %v556
      %v785 = vpop.f32.mrf.mxu0
      %v786 = vadd.f32 %v673, %v785
      %787 = vmatmul.f32.gmra.mxu0 %v558
      %v788 = vpop.f32.mrf.mxu0
      %v789 = vadd.f32 %v676, %v788
      %790 = vmatmul.f32.gmra.mxu0 %v560
      %v791 = vpop.f32.mrf.mxu0
      %v792 = vadd.f32 %v679, %v791
      %793 = vmatmul.f32.gmra.mxu0 %v562
      %v794 = vpop.f32.mrf.mxu0
      %v795 = vadd.f32 %v682, %v794
      %796 = vmatmul.f32.gmra.mxu0 %v564
      %v797 = vpop.f32.mrf.mxu0
      %v798 = vadd.f32 %v685, %v797
      %799 = vmatmul.f32.gmra.mxu0 %v566
      %v800 = vpop.f32.mrf.mxu0
      %v801 = vadd.f32 %v688, %v800
      %802 = vmatmul.f32.gmra.mxu0 %v568
      %v803 = vpop.f32.mrf.mxu0
      %v804 = vadd.f32 %v691, %v803
      %805 = vmatmul.f32.gmra.mxu0 %v570
      %v806 = vpop.f32.mrf.mxu0
      %v807 = vadd.f32 %v694, %v806
      %808 = vmatmul.f32.gmra.mxu0 %v572
      %v809 = vpop.f32.mrf.mxu0
      %v810 = vadd.f32 %v697, %v809
      %811 = vmatmul.f32.gmra.mxu0 %v574
      %v812 = vpop.f32.mrf.mxu0
      %v813 = vadd.f32 %v700, %v812
      %814 = vmatmul.f32.gmra.mxu0 %v576
      %v815 = vpop.f32.mrf.mxu0
      %v816 = vadd.f32 %v703, %v815
      %817 = vmatmul.f32.gmra.mxu0 %v578
      %v818 = vpop.f32.mrf.mxu0
      %v819 = vadd.f32 %v706, %v818
      %820 = vmatmul.f32.gmra.mxu0 %v580
      %v821 = vpop.f32.mrf.mxu0
      %v822 = vadd.f32 %v709, %v821
      %823 = vmatmul.f32.gmra.mxu0 %v582
      %v824 = vpop.f32.mrf.mxu0
      %v825 = vadd.f32 %v712, %v824
      %826 = vmatmul.f32.gmra.mxu0 %v584
      %v827 = vpop.f32.mrf.mxu0
      %v828 = vadd.f32 %v715, %v827
      %829 = vmatmul.f32.gmra.mxu0 %v586
      %v830 = vpop.f32.mrf.mxu0
      %v831 = vadd.f32 %v718, %v830
      %832 = vmatmul.f32.gmra.mxu0 %v588
      %v833 = vpop.f32.mrf.mxu0
      %v834 = vadd.f32 %v721, %v833
      %835 = vmatmul.f32.gmra.mxu0 %v590
      %v836 = vpop.f32.mrf.mxu0
      %v837 = vadd.f32 %v724, %v836
      %838 = vmatmul.f32.gmra.mxu0 %v592
      %v839 = vpop.f32.mrf.mxu0
      %v840 = vadd.f32 %v727, %v839
      %841 = vmatmul.f32.gmra.mxu0 %v594
      %v842 = vpop.f32.mrf.mxu0
      %v843 = vadd.f32 %v730, %v842
      %844 = vmatmul.f32.gmra.mxu0 %v596
      %v845 = vpop.f32.mrf.mxu0
      %v846 = vadd.f32 %v733, %v845
      %847 = vmatmul.f32.gmra.mxu0 %v598
      %v848 = vpop.f32.mrf.mxu0
      %v849 = vadd.f32 %v736, %v848
      %850 = vmatmul.f32.gmra.mxu0 %v600
      %v851 = vpop.f32.mrf.mxu0
      %v852 = vadd.f32 %v739, %v851
      %853 = vmatmul.f32.gmra.mxu0 %v602
      %v854 = vpop.f32.mrf.mxu0
      %v855 = vadd.f32 %v742, %v854
      %856 = vmatmul.f32.gmra.mxu0 %v604
      %v857 = vpop.f32.mrf.mxu0
      %v858 = vadd.f32 %v745, %v857
      %859 = vmatmul.f32.gmra.mxu0 %v606
      %v860 = vpop.f32.mrf.mxu0
      %v861 = vadd.f32 %v748, %v860
      %862 = vmatmul.f32.gmra.mxu0 %v608
      %v863 = vpop.f32.mrf.mxu0
      %v864 = vadd.f32 %v751, %v863
      %865 = vmatmul.f32.gmra.mxu0 %v610
      %v866 = vpop.f32.mrf.mxu0
      %v867 = vadd.f32 %v754, %v866
      %868 = vmatmul.f32.gmra.mxu0 %v612
      %v869 = vpop.f32.mrf.mxu0
      %v870 = vadd.f32 %v757, %v869
      %871 = vmatmul.f32.gmra.mxu0 %v614
      %v872 = vpop.f32.mrf.mxu0
      %v873 = vadd.f32 %v760, %v872
      %874 = vmatmul.f32.gmra.mxu0 %v616
      %v875 = vpop.f32.mrf.mxu0
      %v876 = vadd.f32 %v763, %v875
      %877 = vmatmul.f32.gmra.mxu0 %v618
      %v878 = vpop.f32.mrf.mxu0
      %v879 = vadd.f32 %v766, %v878
      %880 = vdwg.mxu0
      %v881 = vmax.f32 %v786, 0.0
      %v882 = vmax.f32 %v789, 0.0
      %v883 = vmax.f32 %v792, 0.0
      %v884 = vmax.f32 %v795, 0.0
      %v885 = vmax.f32 %v798, 0.0
      %v886 = vmax.f32 %v801, 0.0
      %v887 = vmax.f32 %v804, 0.0
      %v888 = vmax.f32 %v807, 0.0
      %v889 = vmax.f32 %v810, 0.0
      %v890 = vmax.f32 %v813, 0.0
      %v891 = vmax.f32 %v816, 0.0
      %v892 = vmax.f32 %v819, 0.0
      %v893 = vmax.f32 %v822, 0.0
      %v894 = vmax.f32 %v825, 0.0
      %v895 = vmax.f32 %v828, 0.0
      %v896 = vmax.f32 %v831, 0.0
      %v897 = vmax.f32 %v834, 0.0
      %v898 = vmax.f32 %v837, 0.0
      %v899 = vmax.f32 %v840, 0.0
      %v900 = vmax.f32 %v843, 0.0
      %v901 = vmax.f32 %v846, 0.0
      %v902 = vmax.f32 %v849, 0.0
      %v903 = vmax.f32 %v852, 0.0
      %v904 = vmax.f32 %v855, 0.0
      %v905 = vmax.f32 %v858, 0.0
      %v906 = vmax.f32 %v861, 0.0
      %v907 = vmax.f32 %v864, 0.0
      %v908 = vmax.f32 %v867, 0.0
      %v909 = vmax.f32 %v870, 0.0
      %v910 = vmax.f32 %v873, 0.0
      %v911 = vmax.f32 %v876, 0.0
      %v912 = vmax.f32 %v879, 0.0
      %v913 = vld [vmem:[%s3] sm:$0xff]
      %v914 = vld [vmem:[%s3 + $0x8] sm:$0xff]
      %v915 = vld [vmem:[%s3 + $0x10] sm:$0xff]
      %v916 = vld [vmem:[%s3 + $0x18] sm:$0xff]
      %v917 = vld [vmem:[%s3 + $0x20] sm:$0xff]
      %v918 = vld [vmem:[%s3 + $0x28] sm:$0xff]
      %v919 = vld [vmem:[%s3 + $0x30] sm:$0xff]
      %v920 = vld [vmem:[%s3 + $0x38] sm:$0xff]
      %v921 = vld [vmem:[%s3 + $0x40] sm:$0xff]
      %v922 = vld [vmem:[%s3 + $0x48] sm:$0xff]
      %v923 = vld [vmem:[%s3 + $0x50] sm:$0xff]
      %v924 = vld [vmem:[%s3 + $0x58] sm:$0xff]
      %v925 = vld [vmem:[%s3 + $0x60] sm:$0xff]
      %v926 = vld [vmem:[%s3 + $0x68] sm:$0xff]
      %v927 = vld [vmem:[%s3 + $0x70] sm:$0xff]
      %v928 = vld [vmem:[%s3 + $0x78] sm:$0xff]
      %v929 = vld [vmem:[%s4] sm:$0x1]
      %v931 = vperm.slane %v929, 0
      %933 = vmatpush.msra.mxu0 %v928
      %934 = vmatpush.msra.mxu0 %v927
      %935 = vmatpush.msra.mxu0 %v926
      %936 = vmatpush.msra.mxu0 %v925
      %937 = vmatpush.msra.mxu0 %v924
      %938 = vmatpush.msra.mxu0 %v923
      %939 = vmatpush.msra.mxu0 %v922
      %940 = vmatpush.msra.mxu0 %v921
      %941 = vmatpush.msra.mxu0 %v920
      %942 = vmatpush.msra.mxu0 %v919
      %943 = vmatpush.msra.mxu0 %v918
      %944 = vmatpush.msra.mxu0 %v917
      %945 = vmatpush.msra.mxu0 %v916
      %946 = vmatpush.msra.mxu0 %v915
      %947 = vmatpush.msra.mxu0 %v914
      %948 = vmatpush.msra.mxu0 %v913
      %949 = vmatmul.f32.gmra.mxu0 %v881
      %v950 = vpop.f32.mrf.mxu0
      %v951 = vadd.f32 %v931, %v950
      %952 = vmatmul.f32.gmra.mxu0 %v882
      %v953 = vpop.f32.mrf.mxu0
      %v954 = vadd.f32 %v931, %v953
      %955 = vmatmul.f32.gmra.mxu0 %v883
      %v956 = vpop.f32.mrf.mxu0
      %v957 = vadd.f32 %v931, %v956
      %958 = vmatmul.f32.gmra.mxu0 %v884
      %v959 = vpop.f32.mrf.mxu0
      %v960 = vadd.f32 %v931, %v959
      %961 = vmatmul.f32.gmra.mxu0 %v885
      %v962 = vpop.f32.mrf.mxu0
      %v963 = vadd.f32 %v931, %v962
      %964 = vmatmul.f32.gmra.mxu0 %v886
      %v965 = vpop.f32.mrf.mxu0
      %v966 = vadd.f32 %v931, %v965
      %967 = vmatmul.f32.gmra.mxu0 %v887
      %v968 = vpop.f32.mrf.mxu0
      %v969 = vadd.f32 %v931, %v968
      %970 = vmatmul.f32.gmra.mxu0 %v888
      %v971 = vpop.f32.mrf.mxu0
      %v972 = vadd.f32 %v931, %v971
      %973 = vmatmul.f32.gmra.mxu0 %v889
      %v974 = vpop.f32.mrf.mxu0
      %v975 = vadd.f32 %v931, %v974
      %976 = vmatmul.f32.gmra.mxu0 %v890
      %v977 = vpop.f32.mrf.mxu0
      %v978 = vadd.f32 %v931, %v977
      %979 = vmatmul.f32.gmra.mxu0 %v891
      %v980 = vpop.f32.mrf.mxu0
      %v981 = vadd.f32 %v931, %v980
      %982 = vmatmul.f32.gmra.mxu0 %v892
      %v983 = vpop.f32.mrf.mxu0
      %v984 = vadd.f32 %v931, %v983
      %985 = vmatmul.f32.gmra.mxu0 %v893
      %v986 = vpop.f32.mrf.mxu0
      %v987 = vadd.f32 %v931, %v986
      %988 = vmatmul.f32.gmra.mxu0 %v894
      %v989 = vpop.f32.mrf.mxu0
      %v990 = vadd.f32 %v931, %v989
      %991 = vmatmul.f32.gmra.mxu0 %v895
      %v992 = vpop.f32.mrf.mxu0
      %v993 = vadd.f32 %v931, %v992
      %994 = vmatmul.f32.gmra.mxu0 %v896
      %v995 = vpop.f32.mrf.mxu0
      %v996 = vadd.f32 %v931, %v995
      %997 = vmatmul.f32.gmra.mxu0 %v897
      %v998 = vpop.f32.mrf.mxu0
      %v999 = vadd.f32 %v931, %v998
      %1000 = vmatmul.f32.gmra.mxu0 %v898
      %v1001 = vpop.f32.mrf.mxu0
      %v1002 = vadd.f32 %v931, %v1001
      %1003 = vmatmul.f32.gmra.mxu0 %v899
      %v1004 = vpop.f32.mrf.mxu0
      %v1005 = vadd.f32 %v931, %v1004
      %1006 = vmatmul.f32.gmra.mxu0 %v900
      %v1007 = vpop.f32.mrf.mxu0
      %v1008 = vadd.f32 %v931, %v1007
      %1009 = vmatmul.f32.gmra.mxu0 %v901
      %v1010 = vpop.f32.mrf.mxu0
      %v1011 = vadd.f32 %v931, %v1010
      %1012 = vmatmul.f32.gmra.mxu0 %v902
      %v1013 = vpop.f32.mrf.mxu0
      %v1014 = vadd.f32 %v931, %v1013
      %1015 = vmatmul.f32.gmra.mxu0 %v903
      %v1016 = vpop.f32.mrf.mxu0
      %v1017 = vadd.f32 %v931, %v1016
      %1018 = vmatmul.f32.gmra.mxu0 %v904
      %v1019 = vpop.f32.mrf.mxu0
      %v1020 = vadd.f32 %v931, %v1019
      %1021 = vmatmul.f32.gmra.mxu0 %v905
      %v1022 = vpop.f32.mrf.mxu0
      %v1023 = vadd.f32 %v931, %v1022
      %1024 = vmatmul.f32.gmra.mxu0 %v906
      %v1025 = vpop.f32.mrf.mxu0
      %v1026 = vadd.f32 %v931, %v1025
      %1027 = vmatmul.f32.gmra.mxu0 %v907
      %v1028 = vpop.f32.mrf.mxu0
      %v1029 = vadd.f32 %v931, %v1028
      %1030 = vmatmul.f32.gmra.mxu0 %v908
      %v1031 = vpop.f32.mrf.mxu0
      %v1032 = vadd.f32 %v931, %v1031
      %1033 = vmatmul.f32.gmra.mxu0 %v909
      %v1034 = vpop.f32.mrf.mxu0
      %v1035 = vadd.f32 %v931, %v1034
      %1036 = vmatmul.f32.gmra.mxu0 %v910
      %v1037 = vpop.f32.mrf.mxu0
      %v1038 = vadd.f32 %v931, %v1037
      %1039 = vmatmul.f32.gmra.mxu0 %v911
      %v1040 = vpop.f32.mrf.mxu0
      %v1041 = vadd.f32 %v931, %v1040
      %1042 = vmatmul.f32.gmra.mxu0 %v912
      %v1043 = vpop.f32.mrf.mxu0
      %v1044 = vadd.f32 %v931, %v1043
      %1045 = vdwg.mxu0
      %v1046 = vmax.f32 %v951, 0.0
      %v1047 = vmax.f32 %v954, 0.0
      %v1048 = vmax.f32 %v957, 0.0
      %v1049 = vmax.f32 %v960, 0.0
      %v1050 = vmax.f32 %v963, 0.0
      %v1051 = vmax.f32 %v966, 0.0
      %v1052 = vmax.f32 %v969, 0.0
      %v1053 = vmax.f32 %v972, 0.0
      %v1054 = vmax.f32 %v975, 0.0
      %v1055 = vmax.f32 %v978, 0.0
      %v1056 = vmax.f32 %v981, 0.0
      %v1057 = vmax.f32 %v984, 0.0
      %v1058 = vmax.f32 %v987, 0.0
      %v1059 = vmax.f32 %v990, 0.0
      %v1060 = vmax.f32 %v993, 0.0
      %v1061 = vmax.f32 %v996, 0.0
      %v1062 = vmax.f32 %v999, 0.0
      %v1063 = vmax.f32 %v1002, 0.0
      %v1064 = vmax.f32 %v1005, 0.0
      %v1065 = vmax.f32 %v1008, 0.0
      %v1066 = vmax.f32 %v1011, 0.0
      %v1067 = vmax.f32 %v1014, 0.0
      %v1068 = vmax.f32 %v1017, 0.0
      %v1069 = vmax.f32 %v1020, 0.0
      %v1070 = vmax.f32 %v1023, 0.0
      %v1071 = vmax.f32 %v1026, 0.0
      %v1072 = vmax.f32 %v1029, 0.0
      %v1073 = vmax.f32 %v1032, 0.0
      %v1074 = vmax.f32 %v1035, 0.0
      %v1075 = vmax.f32 %v1038, 0.0
      %v1076 = vmax.f32 %v1041, 0.0
      %v1077 = vmax.f32 %v1044, 0.0
      %v1078 = vld [vmem:[%s5] sm:$0xff]
      %v1079 = vld [vmem:[%s5 + $0x8] sm:$0xff]
      %v1080 = vld [vmem:[%s5 + $0x10] sm:$0xff]
      %v1081 = vld [vmem:[%s5 + $0x18] sm:$0xff]
      %v1082 = vld [vmem:[%s5 + $0x20] sm:$0xff]
      %v1083 = vld [vmem:[%s5 + $0x28] sm:$0xff]
      %v1084 = vld [vmem:[%s5 + $0x30] sm:$0xff]
      %v1085 = vld [vmem:[%s5 + $0x38] sm:$0xff]
      %v1086 = vld [vmem:[%s5 + $0x40] sm:$0xff]
      %v1087 = vld [vmem:[%s5 + $0x48] sm:$0xff]
      %v1088 = vld [vmem:[%s5 + $0x50] sm:$0xff]
      %v1089 = vld [vmem:[%s5 + $0x58] sm:$0xff]
      %v1090 = vld [vmem:[%s5 + $0x60] sm:$0xff]
      %v1091 = vld [vmem:[%s5 + $0x68] sm:$0xff]
      %v1092 = vld [vmem:[%s5 + $0x70] sm:$0xff]
      %v1093 = vld [vmem:[%s5 + $0x78] sm:$0xff]
      %v1094 = vld [vmem:[%s6] sm:$0x1]
      %v1096 = vperm.slane %v1094, 0
      %1098 = vmatpush.msra.mxu0 %v1093
      %1099 = vmatpush.msra.mxu0 %v1092
      %1100 = vmatpush.msra.mxu0 %v1091
      %1101 = vmatpush.msra.mxu0 %v1090
      %1102 = vmatpush.msra.mxu0 %v1089
      %1103 = vmatpush.msra.mxu0 %v1088
      %1104 = vmatpush.msra.mxu0 %v1087
      %1105 = vmatpush.msra.mxu0 %v1086
      %1106 = vmatpush.msra.mxu0 %v1085
      %1107 = vmatpush.msra.mxu0 %v1084
      %1108 = vmatpush.msra.mxu0 %v1083
      %1109 = vmatpush.msra.mxu0 %v1082
      %1110 = vmatpush.msra.mxu0 %v1081
      %1111 = vmatpush.msra.mxu0 %v1080
      %1112 = vmatpush.msra.mxu0 %v1079
      %1113 = vmatpush.msra.mxu0 %v1078
      %1114 = vmatmul.f32.gmra.mxu0 %v1046
      %v1115 = vpop.f32.mrf.mxu0
      %v1116 = vadd.f32 %v1096, %v1115
      %1117 = vmatmul.f32.gmra.mxu0 %v1047
      %v1118 = vpop.f32.mrf.mxu0
      %v1119 = vadd.f32 %v1096, %v1118
      %1120 = vmatmul.f32.gmra.mxu0 %v1048
      %v1121 = vpop.f32.mrf.mxu0
      %v1122 = vadd.f32 %v1096, %v1121
      %1123 = vmatmul.f32.gmra.mxu0 %v1049
      %v1124 = vpop.f32.mrf.mxu0
      %v1125 = vadd.f32 %v1096, %v1124
      %1126 = vmatmul.f32.gmra.mxu0 %v1050
      %v1127 = vpop.f32.mrf.mxu0
      %v1128 = vadd.f32 %v1096, %v1127
      %1129 = vmatmul.f32.gmra.mxu0 %v1051
      %v1130 = vpop.f32.mrf.mxu0
      %v1131 = vadd.f32 %v1096, %v1130
      %1132 = vmatmul.f32.gmra.mxu0 %v1052
      %v1133 = vpop.f32.mrf.mxu0
      %v1134 = vadd.f32 %v1096, %v1133
      %1135 = vmatmul.f32.gmra.mxu0 %v1053
      %v1136 = vpop.f32.mrf.mxu0
      %v1137 = vadd.f32 %v1096, %v1136
      %1138 = vmatmul.f32.gmra.mxu0 %v1054
      %v1139 = vpop.f32.mrf.mxu0
      %v1140 = vadd.f32 %v1096, %v1139
      %1141 = vmatmul.f32.gmra.mxu0 %v1055
      %v1142 = vpop.f32.mrf.mxu0
      %v1143 = vadd.f32 %v1096, %v1142
      %1144 = vmatmul.f32.gmra.mxu0 %v1056
      %v1145 = vpop.f32.mrf.mxu0
      %v1146 = vadd.f32 %v1096, %v1145
      %1147 = vmatmul.f32.gmra.mxu0 %v1057
      %v1148 = vpop.f32.mrf.mxu0
      %v1149 = vadd.f32 %v1096, %v1148
      %1150 = vmatmul.f32.gmra.mxu0 %v1058
      %v1151 = vpop.f32.mrf.mxu0
      %v1152 = vadd.f32 %v1096, %v1151
      %1153 = vmatmul.f32.gmra.mxu0 %v1059
      %v1154 = vpop.f32.mrf.mxu0
      %v1155 = vadd.f32 %v1096, %v1154
      %1156 = vmatmul.f32.gmra.mxu0 %v1060
      %v1157 = vpop.f32.mrf.mxu0
      %v1158 = vadd.f32 %v1096, %v1157
      %1159 = vmatmul.f32.gmra.mxu0 %v1061
      %v1160 = vpop.f32.mrf.mxu0
      %v1161 = vadd.f32 %v1096, %v1160
      %1162 = vmatmul.f32.gmra.mxu0 %v1062
      %v1163 = vpop.f32.mrf.mxu0
      %v1164 = vadd.f32 %v1096, %v1163
      %1165 = vmatmul.f32.gmra.mxu0 %v1063
      %v1166 = vpop.f32.mrf.mxu0
      %v1167 = vadd.f32 %v1096, %v1166
      %1168 = vmatmul.f32.gmra.mxu0 %v1064
      %v1169 = vpop.f32.mrf.mxu0
      %v1170 = vadd.f32 %v1096, %v1169
      %1171 = vmatmul.f32.gmra.mxu0 %v1065
      %v1172 = vpop.f32.mrf.mxu0
      %v1173 = vadd.f32 %v1096, %v1172
      %1174 = vmatmul.f32.gmra.mxu0 %v1066
      %v1175 = vpop.f32.mrf.mxu0
      %v1176 = vadd.f32 %v1096, %v1175
      %1177 = vmatmul.f32.gmra.mxu0 %v1067
      %v1178 = vpop.f32.mrf.mxu0
      %v1179 = vadd.f32 %v1096, %v1178
      %1180 = vmatmul.f32.gmra.mxu0 %v1068
      %v1181 = vpop.f32.mrf.mxu0
      %v1182 = vadd.f32 %v1096, %v1181
      %1183 = vmatmul.f32.gmra.mxu0 %v1069
      %v1184 = vpop.f32.mrf.mxu0
      %v1185 = vadd.f32 %v1096, %v1184
      %1186 = vmatmul.f32.gmra.mxu0 %v1070
      %v1187 = vpop.f32.mrf.mxu0
      %v1188 = vadd.f32 %v1096, %v1187
      %1189 = vmatmul.f32.gmra.mxu0 %v1071
      %v1190 = vpop.f32.mrf.mxu0
      %v1191 = vadd.f32 %v1096, %v1190
      %1192 = vmatmul.f32.gmra.mxu0 %v1072
      %v1193 = vpop.f32.mrf.mxu0
      %v1194 = vadd.f32 %v1096, %v1193
      %1195 = vmatmul.f32.gmra.mxu0 %v1073
      %v1196 = vpop.f32.mrf.mxu0
      %v1197 = vadd.f32 %v1096, %v1196
      %1198 = vmatmul.f32.gmra.mxu0 %v1074
      %v1199 = vpop.f32.mrf.mxu0
      %v1200 = vadd.f32 %v1096, %v1199
      %1201 = vmatmul.f32.gmra.mxu0 %v1075
      %v1202 = vpop.f32.mrf.mxu0
      %v1203 = vadd.f32 %v1096, %v1202
      %1204 = vmatmul.f32.gmra.mxu0 %v1076
      %v1205 = vpop.f32.mrf.mxu0
      %v1206 = vadd.f32 %v1096, %v1205
      %1207 = vmatmul.f32.gmra.mxu0 %v1077
      %v1208 = vpop.f32.mrf.mxu0
      %v1209 = vadd.f32 %v1096, %v1208
      %1210 = vdwg.mxu0
      %v1211 = vmax.f32 %v1116, 0.0
      %v1212 = vmax.f32 %v1119, 0.0
      %v1213 = vmax.f32 %v1122, 0.0
      %v1214 = vmax.f32 %v1125, 0.0
      %v1215 = vmax.f32 %v1128, 0.0
      %v1216 = vmax.f32 %v1131, 0.0
      %v1217 = vmax.f32 %v1134, 0.0
      %v1218 = vmax.f32 %v1137, 0.0
      %v1219 = vmax.f32 %v1140, 0.0
      %v1220 = vmax.f32 %v1143, 0.0
      %v1221 = vmax.f32 %v1146, 0.0
      %v1222 = vmax.f32 %v1149, 0.0
      %v1223 = vmax.f32 %v1152, 0.0
      %v1224 = vmax.f32 %v1155, 0.0
      %v1225 = vmax.f32 %v1158, 0.0
      %v1226 = vmax.f32 %v1161, 0.0
      %v1227 = vmax.f32 %v1164, 0.0
      %v1228 = vmax.f32 %v1167, 0.0
      %v1229 = vmax.f32 %v1170, 0.0
      %v1230 = vmax.f32 %v1173, 0.0
      %v1231 = vmax.f32 %v1176, 0.0
      %v1232 = vmax.f32 %v1179, 0.0
      %v1233 = vmax.f32 %v1182, 0.0
      %v1234 = vmax.f32 %v1185, 0.0
      %v1235 = vmax.f32 %v1188, 0.0
      %v1236 = vmax.f32 %v1191, 0.0
      %v1237 = vmax.f32 %v1194, 0.0
      %v1238 = vmax.f32 %v1197, 0.0
      %v1239 = vmax.f32 %v1200, 0.0
      %v1240 = vmax.f32 %v1203, 0.0
      %v1241 = vmax.f32 %v1206, 0.0
      %v1242 = vmax.f32 %v1209, 0.0
      %v1243 = vld [vmem:[%s7] sm:$0xff]
      %v1244 = vld [vmem:[%s7 + $0x8] sm:$0xff]
      %v1245 = vld [vmem:[%s7 + $0x10] sm:$0xff]
      %v1246 = vld [vmem:[%s7 + $0x18] sm:$0xff]
      %v1247 = vld [vmem:[%s7 + $0x20] sm:$0xff]
      %v1248 = vld [vmem:[%s7 + $0x28] sm:$0xff]
      %v1249 = vld [vmem:[%s7 + $0x30] sm:$0xff]
      %v1250 = vld [vmem:[%s7 + $0x38] sm:$0xff]
      %v1251 = vld [vmem:[%s7 + $0x40] sm:$0xff]
      %v1252 = vld [vmem:[%s7 + $0x48] sm:$0xff]
      %v1253 = vld [vmem:[%s7 + $0x50] sm:$0xff]
      %v1254 = vld [vmem:[%s7 + $0x58] sm:$0xff]
      %v1255 = vld [vmem:[%s7 + $0x60] sm:$0xff]
      %v1256 = vld [vmem:[%s7 + $0x68] sm:$0xff]
      %v1257 = vld [vmem:[%s7 + $0x70] sm:$0xff]
      %v1258 = vld [vmem:[%s7 + $0x78] sm:$0xff]
      %v1259 = vld [vmem:[%s8] sm:$0x1]
      %v1261 = vperm.slane %v1259, 0
      %1263 = vmatpush.msra.mxu0 %v1258
      %1264 = vmatpush.msra.mxu0 %v1257
      %1265 = vmatpush.msra.mxu0 %v1256
      %1266 = vmatpush.msra.mxu0 %v1255
      %1267 = vmatpush.msra.mxu0 %v1254
      %1268 = vmatpush.msra.mxu0 %v1253
      %1269 = vmatpush.msra.mxu0 %v1252
      %1270 = vmatpush.msra.mxu0 %v1251
      %1271 = vmatpush.msra.mxu0 %v1250
      %1272 = vmatpush.msra.mxu0 %v1249
      %1273 = vmatpush.msra.mxu0 %v1248
      %1274 = vmatpush.msra.mxu0 %v1247
      %1275 = vmatpush.msra.mxu0 %v1246
      %1276 = vmatpush.msra.mxu0 %v1245
      %1277 = vmatpush.msra.mxu0 %v1244
      %1278 = vmatpush.msra.mxu0 %v1243
      %1279 = vmatmul.f32.gmra.mxu0 %v1211
      %v1280 = vpop.f32.mrf.mxu0
      %v1281 = vadd.f32 %v1261, %v1280
      %1282 = vmatmul.f32.gmra.mxu0 %v1212
      %v1283 = vpop.f32.mrf.mxu0
      %v1284 = vadd.f32 %v1261, %v1283
      %1285 = vmatmul.f32.gmra.mxu0 %v1213
      %v1286 = vpop.f32.mrf.mxu0
      %v1287 = vadd.f32 %v1261, %v1286
      %1288 = vmatmul.f32.gmra.mxu0 %v1214
      %v1289 = vpop.f32.mrf.mxu0
      %v1290 = vadd.f32 %v1261, %v1289
      %1291 = vmatmul.f32.gmra.mxu0 %v1215
      %v1292 = vpop.f32.mrf.mxu0
      %v1293 = vadd.f32 %v1261, %v1292
      %1294 = vmatmul.f32.gmra.mxu0 %v1216
      %v1295 = vpop.f32.mrf.mxu0
      %v1296 = vadd.f32 %v1261, %v1295
      %1297 = vmatmul.f32.gmra.mxu0 %v1217
      %v1298 = vpop.f32.mrf.mxu0
      %v1299 = vadd.f32 %v1261, %v1298
      %1300 = vmatmul.f32.gmra.mxu0 %v1218
      %v1301 = vpop.f32.mrf.mxu0
      %v1302 = vadd.f32 %v1261, %v1301
      %1303 = vmatmul.f32.gmra.mxu0 %v1219
      %v1304 = vpop.f32.mrf.mxu0
      %v1305 = vadd.f32 %v1261, %v1304
      %1306 = vmatmul.f32.gmra.mxu0 %v1220
      %v1307 = vpop.f32.mrf.mxu0
      %v1308 = vadd.f32 %v1261, %v1307
      %1309 = vmatmul.f32.gmra.mxu0 %v1221
      %v1310 = vpop.f32.mrf.mxu0
      %v1311 = vadd.f32 %v1261, %v1310
      %1312 = vmatmul.f32.gmra.mxu0 %v1222
      %v1313 = vpop.f32.mrf.mxu0
      %v1314 = vadd.f32 %v1261, %v1313
      %1315 = vmatmul.f32.gmra.mxu0 %v1223
      %v1316 = vpop.f32.mrf.mxu0
      %v1317 = vadd.f32 %v1261, %v1316
      %1318 = vmatmul.f32.gmra.mxu0 %v1224
      %v1319 = vpop.f32.mrf.mxu0
      %v1320 = vadd.f32 %v1261, %v1319
      %1321 = vmatmul.f32.gmra.mxu0 %v1225
      %v1322 = vpop.f32.mrf.mxu0
      %v1323 = vadd.f32 %v1261, %v1322
      %1324 = vmatmul.f32.gmra.mxu0 %v1226
      %v1325 = vpop.f32.mrf.mxu0
      %v1326 = vadd.f32 %v1261, %v1325
      %1327 = vmatmul.f32.gmra.mxu0 %v1227
      %v1328 = vpop.f32.mrf.mxu0
      %v1329 = vadd.f32 %v1261, %v1328
      %1330 = vmatmul.f32.gmra.mxu0 %v1228
      %v1331 = vpop.f32.mrf.mxu0
      %v1332 = vadd.f32 %v1261, %v1331
      %1333 = vmatmul.f32.gmra.mxu0 %v1229
      %v1334 = vpop.f32.mrf.mxu0
      %v1335 = vadd.f32 %v1261, %v1334
      %1336 = vmatmul.f32.gmra.mxu0 %v1230
      %v1337 = vpop.f32.mrf.mxu0
      %v1338 = vadd.f32 %v1261, %v1337
      %1339 = vmatmul.f32.gmra.mxu0 %v1231
      %v1340 = vpop.f32.mrf.mxu0
      %v1341 = vadd.f32 %v1261, %v1340
      %1342 = vmatmul.f32.gmra.mxu0 %v1232
      %v1343 = vpop.f32.mrf.mxu0
      %v1344 = vadd.f32 %v1261, %v1343
      %1345 = vmatmul.f32.gmra.mxu0 %v1233
      %v1346 = vpop.f32.mrf.mxu0
      %v1347 = vadd.f32 %v1261, %v1346
      %1348 = vmatmul.f32.gmra.mxu0 %v1234
      %v1349 = vpop.f32.mrf.mxu0
      %v1350 = vadd.f32 %v1261, %v1349
      %1351 = vmatmul.f32.gmra.mxu0 %v1235
      %v1352 = vpop.f32.mrf.mxu0
      %v1353 = vadd.f32 %v1261, %v1352
      %1354 = vmatmul.f32.gmra.mxu0 %v1236
      %v1355 = vpop.f32.mrf.mxu0
      %v1356 = vadd.f32 %v1261, %v1355
      %1357 = vmatmul.f32.gmra.mxu0 %v1237
      %v1358 = vpop.f32.mrf.mxu0
      %v1359 = vadd.f32 %v1261, %v1358
      %1360 = vmatmul.f32.gmra.mxu0 %v1238
      %v1361 = vpop.f32.mrf.mxu0
      %v1362 = vadd.f32 %v1261, %v1361
      %1363 = vmatmul.f32.gmra.mxu0 %v1239
      %v1364 = vpop.f32.mrf.mxu0
      %v1365 = vadd.f32 %v1261, %v1364
      %1366 = vmatmul.f32.gmra.mxu0 %v1240
      %v1367 = vpop.f32.mrf.mxu0
      %v1368 = vadd.f32 %v1261, %v1367
      %1369 = vmatmul.f32.gmra.mxu0 %v1241
      %v1370 = vpop.f32.mrf.mxu0
      %v1371 = vadd.f32 %v1261, %v1370
      %1372 = vmatmul.f32.gmra.mxu0 %v1242
      %v1373 = vpop.f32.mrf.mxu0
      %v1374 = vadd.f32 %v1261, %v1373
      %1375 = vdwg.mxu0
      %v1376 = vmax.f32 %v1281, 0.0
      %v1377 = vmax.f32 %v1284, 0.0
      %v1378 = vmax.f32 %v1287, 0.0
      %v1379 = vmax.f32 %v1290, 0.0
      %v1380 = vmax.f32 %v1293, 0.0
      %v1381 = vmax.f32 %v1296, 0.0
      %v1382 = vmax.f32 %v1299, 0.0
      %v1383 = vmax.f32 %v1302, 0.0
      %v1384 = vmax.f32 %v1305, 0.0
      %v1385 = vmax.f32 %v1308, 0.0
      %v1386 = vmax.f32 %v1311, 0.0
      %v1387 = vmax.f32 %v1314, 0.0
      %v1388 = vmax.f32 %v1317, 0.0
      %v1389 = vmax.f32 %v1320, 0.0
      %v1390 = vmax.f32 %v1323, 0.0
      %v1391 = vmax.f32 %v1326, 0.0
      %v1392 = vmax.f32 %v1329, 0.0
      %v1393 = vmax.f32 %v1332, 0.0
      %v1394 = vmax.f32 %v1335, 0.0
      %v1395 = vmax.f32 %v1338, 0.0
      %v1396 = vmax.f32 %v1341, 0.0
      %v1397 = vmax.f32 %v1344, 0.0
      %v1398 = vmax.f32 %v1347, 0.0
      %v1399 = vmax.f32 %v1350, 0.0
      %v1400 = vmax.f32 %v1353, 0.0
      %v1401 = vmax.f32 %v1356, 0.0
      %v1402 = vmax.f32 %v1359, 0.0
      %v1403 = vmax.f32 %v1362, 0.0
      %v1404 = vmax.f32 %v1365, 0.0
      %v1405 = vmax.f32 %v1368, 0.0
      %v1406 = vmax.f32 %v1371, 0.0
      %v1407 = vmax.f32 %v1374, 0.0
      %v1408 = vld [vmem:[%s9] sm:$0xff]
      %v1409 = vld [vmem:[%s9 + $0x8] sm:$0xff]
      %v1410 = vld [vmem:[%s9 + $0x10] sm:$0xff]
      %v1411 = vld [vmem:[%s9 + $0x18] sm:$0xff]
      %v1412 = vld [vmem:[%s9 + $0x20] sm:$0xff]
      %v1413 = vld [vmem:[%s9 + $0x28] sm:$0xff]
      %v1414 = vld [vmem:[%s9 + $0x30] sm:$0xff]
      %v1415 = vld [vmem:[%s9 + $0x38] sm:$0xff]
      %v1416 = vld [vmem:[%s9 + $0x40] sm:$0xff]
      %v1417 = vld [vmem:[%s9 + $0x48] sm:$0xff]
      %v1418 = vld [vmem:[%s9 + $0x50] sm:$0xff]
      %v1419 = vld [vmem:[%s9 + $0x58] sm:$0xff]
      %v1420 = vld [vmem:[%s9 + $0x60] sm:$0xff]
      %v1421 = vld [vmem:[%s9 + $0x68] sm:$0xff]
      %v1422 = vld [vmem:[%s9 + $0x70] sm:$0xff]
      %v1423 = vld [vmem:[%s9 + $0x78] sm:$0xff]
      %v1424 = vld [vmem:[%s10] sm:$0x1]
      %v1426 = vperm.slane %v1424, 0
      %1428 = vmatpush.msra.mxu0 %v1423
      %1429 = vmatpush.msra.mxu0 %v1422
      %1430 = vmatpush.msra.mxu0 %v1421
      %1431 = vmatpush.msra.mxu0 %v1420
      %1432 = vmatpush.msra.mxu0 %v1419
      %1433 = vmatpush.msra.mxu0 %v1418
      %1434 = vmatpush.msra.mxu0 %v1417
      %1435 = vmatpush.msra.mxu0 %v1416
      %1436 = vmatpush.msra.mxu0 %v1415
      %1437 = vmatpush.msra.mxu0 %v1414
      %1438 = vmatpush.msra.mxu0 %v1413
      %1439 = vmatpush.msra.mxu0 %v1412
      %1440 = vmatpush.msra.mxu0 %v1411
      %1441 = vmatpush.msra.mxu0 %v1410
      %1442 = vmatpush.msra.mxu0 %v1409
      %1443 = vmatpush.msra.mxu0 %v1408
      %1444 = vmatmul.f32.gmra.mxu0 %v1376
      %v1445 = vpop.f32.mrf.mxu0
      %v1446 = vadd.f32 %v1426, %v1445
      %1447 = vmatmul.f32.gmra.mxu0 %v1377
      %v1448 = vpop.f32.mrf.mxu0
      %v1449 = vadd.f32 %v1426, %v1448
      %1450 = vmatmul.f32.gmra.mxu0 %v1378
      %v1451 = vpop.f32.mrf.mxu0
      %v1452 = vadd.f32 %v1426, %v1451
      %1453 = vmatmul.f32.gmra.mxu0 %v1379
      %v1454 = vpop.f32.mrf.mxu0
      %v1455 = vadd.f32 %v1426, %v1454
      %1456 = vmatmul.f32.gmra.mxu0 %v1380
      %v1457 = vpop.f32.mrf.mxu0
      %v1458 = vadd.f32 %v1426, %v1457
      %1459 = vmatmul.f32.gmra.mxu0 %v1381
      %v1460 = vpop.f32.mrf.mxu0
      %v1461 = vadd.f32 %v1426, %v1460
      %1462 = vmatmul.f32.gmra.mxu0 %v1382
      %v1463 = vpop.f32.mrf.mxu0
      %v1464 = vadd.f32 %v1426, %v1463
      %1465 = vmatmul.f32.gmra.mxu0 %v1383
      %v1466 = vpop.f32.mrf.mxu0
      %v1467 = vadd.f32 %v1426, %v1466
      %1468 = vmatmul.f32.gmra.mxu0 %v1384
      %v1469 = vpop.f32.mrf.mxu0
      %v1470 = vadd.f32 %v1426, %v1469
      %1471 = vmatmul.f32.gmra.mxu0 %v1385
      %v1472 = vpop.f32.mrf.mxu0
      %v1473 = vadd.f32 %v1426, %v1472
      %1474 = vmatmul.f32.gmra.mxu0 %v1386
      %v1475 = vpop.f32.mrf.mxu0
      %v1476 = vadd.f32 %v1426, %v1475
      %1477 = vmatmul.f32.gmra.mxu0 %v1387
      %v1478 = vpop.f32.mrf.mxu0
      %v1479 = vadd.f32 %v1426, %v1478
      %1480 = vmatmul.f32.gmra.mxu0 %v1388
      %v1481 = vpop.f32.mrf.mxu0
      %v1482 = vadd.f32 %v1426, %v1481
      %1483 = vmatmul.f32.gmra.mxu0 %v1389
      %v1484 = vpop.f32.mrf.mxu0
      %v1485 = vadd.f32 %v1426, %v1484
      %1486 = vmatmul.f32.gmra.mxu0 %v1390
      %v1487 = vpop.f32.mrf.mxu0
      %v1488 = vadd.f32 %v1426, %v1487
      %1489 = vmatmul.f32.gmra.mxu0 %v1391
      %v1490 = vpop.f32.mrf.mxu0
      %v1491 = vadd.f32 %v1426, %v1490
      %1492 = vmatmul.f32.gmra.mxu0 %v1392
      %v1493 = vpop.f32.mrf.mxu0
      %v1494 = vadd.f32 %v1426, %v1493
      %1495 = vmatmul.f32.gmra.mxu0 %v1393
      %v1496 = vpop.f32.mrf.mxu0
      %v1497 = vadd.f32 %v1426, %v1496
      %1498 = vmatmul.f32.gmra.mxu0 %v1394
      %v1499 = vpop.f32.mrf.mxu0
      %v1500 = vadd.f32 %v1426, %v1499
      %1501 = vmatmul.f32.gmra.mxu0 %v1395
      %v1502 = vpop.f32.mrf.mxu0
      %v1503 = vadd.f32 %v1426, %v1502
      %1504 = vmatmul.f32.gmra.mxu0 %v1396
      %v1505 = vpop.f32.mrf.mxu0
      %v1506 = vadd.f32 %v1426, %v1505
      %1507 = vmatmul.f32.gmra.mxu0 %v1397
      %v1508 = vpop.f32.mrf.mxu0
      %v1509 = vadd.f32 %v1426, %v1508
      %1510 = vmatmul.f32.gmra.mxu0 %v1398
      %v1511 = vpop.f32.mrf.mxu0
      %v1512 = vadd.f32 %v1426, %v1511
      %1513 = vmatmul.f32.gmra.mxu0 %v1399
      %v1514 = vpop.f32.mrf.mxu0
      %v1515 = vadd.f32 %v1426, %v1514
      %1516 = vmatmul.f32.gmra.mxu0 %v1400
      %v1517 = vpop.f32.mrf.mxu0
      %v1518 = vadd.f32 %v1426, %v1517
      %1519 = vmatmul.f32.gmra.mxu0 %v1401
      %v1520 = vpop.f32.mrf.mxu0
      %v1521 = vadd.f32 %v1426, %v1520
      %1522 = vmatmul.f32.gmra.mxu0 %v1402
      %v1523 = vpop.f32.mrf.mxu0
      %v1524 = vadd.f32 %v1426, %v1523
      %1525 = vmatmul.f32.gmra.mxu0 %v1403
      %v1526 = vpop.f32.mrf.mxu0
      %v1527 = vadd.f32 %v1426, %v1526
      %1528 = vmatmul.f32.gmra.mxu0 %v1404
      %v1529 = vpop.f32.mrf.mxu0
      %v1530 = vadd.f32 %v1426, %v1529
      %1531 = vmatmul.f32.gmra.mxu0 %v1405
      %v1532 = vpop.f32.mrf.mxu0
      %v1533 = vadd.f32 %v1426, %v1532
      %1534 = vmatmul.f32.gmra.mxu0 %v1406
      %v1535 = vpop.f32.mrf.mxu0
      %v1536 = vadd.f32 %v1426, %v1535
      %1537 = vmatmul.f32.gmra.mxu0 %v1407
      %v1538 = vpop.f32.mrf.mxu0
      %v1539 = vadd.f32 %v1426, %v1538
      %1540 = vdwg.mxu0
      %v1541 = vmax.f32 %v1446, 0.0
      %v1542 = vmax.f32 %v1449, 0.0
      %v1543 = vmax.f32 %v1452, 0.0
      %v1544 = vmax.f32 %v1455, 0.0
      %v1545 = vmax.f32 %v1458, 0.0
      %v1546 = vmax.f32 %v1461, 0.0
      %v1547 = vmax.f32 %v1464, 0.0
      %v1548 = vmax.f32 %v1467, 0.0
      %v1549 = vmax.f32 %v1470, 0.0
      %v1550 = vmax.f32 %v1473, 0.0
      %v1551 = vmax.f32 %v1476, 0.0
      %v1552 = vmax.f32 %v1479, 0.0
      %v1553 = vmax.f32 %v1482, 0.0
      %v1554 = vmax.f32 %v1485, 0.0
      %v1555 = vmax.f32 %v1488, 0.0
      %v1556 = vmax.f32 %v1491, 0.0
      %v1557 = vmax.f32 %v1494, 0.0
      %v1558 = vmax.f32 %v1497, 0.0
      %v1559 = vmax.f32 %v1500, 0.0
      %v1560 = vmax.f32 %v1503, 0.0
      %v1561 = vmax.f32 %v1506, 0.0
      %v1562 = vmax.f32 %v1509, 0.0
      %v1563 = vmax.f32 %v1512, 0.0
      %v1564 = vmax.f32 %v1515, 0.0
      %v1565 = vmax.f32 %v1518, 0.0
      %v1566 = vmax.f32 %v1521, 0.0
      %v1567 = vmax.f32 %v1524, 0.0
      %v1568 = vmax.f32 %v1527, 0.0
      %v1569 = vmax.f32 %v1530, 0.0
      %v1570 = vmax.f32 %v1533, 0.0
      %v1571 = vmax.f32 %v1536, 0.0
      %v1572 = vmax.f32 %v1539, 0.0
      %v1573 = vld [vmem:[%s11] sm:$0xff]
      %v1574 = vld [vmem:[%s11 + $0x8] sm:$0xff]
      %v1575 = vld [vmem:[%s11 + $0x10] sm:$0xff]
      %v1576 = vld [vmem:[%s11 + $0x18] sm:$0xff]
      %v1577 = vld [vmem:[%s11 + $0x20] sm:$0xff]
      %v1578 = vld [vmem:[%s11 + $0x28] sm:$0xff]
      %v1579 = vld [vmem:[%s11 + $0x30] sm:$0xff]
      %v1580 = vld [vmem:[%s11 + $0x38] sm:$0xff]
      %v1581 = vld [vmem:[%s11 + $0x40] sm:$0xff]
      %v1582 = vld [vmem:[%s11 + $0x48] sm:$0xff]
      %v1583 = vld [vmem:[%s11 + $0x50] sm:$0xff]
      %v1584 = vld [vmem:[%s11 + $0x58] sm:$0xff]
      %v1585 = vld [vmem:[%s11 + $0x60] sm:$0xff]
      %v1586 = vld [vmem:[%s11 + $0x68] sm:$0xff]
      %v1587 = vld [vmem:[%s11 + $0x70] sm:$0xff]
      %v1588 = vld [vmem:[%s11 + $0x78] sm:$0xff]
      %v1589 = vld [vmem:[%s12] sm:$0x1]
      %v1591 = vperm.slane %v1589, 0
      %1593 = vmatpush.msra.mxu0 %v1588
      %1594 = vmatpush.msra.mxu0 %v1587
      %1595 = vmatpush.msra.mxu0 %v1586
      %1596 = vmatpush.msra.mxu0 %v1585
      %1597 = vmatpush.msra.mxu0 %v1584
      %1598 = vmatpush.msra.mxu0 %v1583
      %1599 = vmatpush.msra.mxu0 %v1582
      %1600 = vmatpush.msra.mxu0 %v1581
      %1601 = vmatpush.msra.mxu0 %v1580
      %1602 = vmatpush.msra.mxu0 %v1579
      %1603 = vmatpush.msra.mxu0 %v1578
      %1604 = vmatpush.msra.mxu0 %v1577
      %1605 = vmatpush.msra.mxu0 %v1576
      %1606 = vmatpush.msra.mxu0 %v1575
      %1607 = vmatpush.msra.mxu0 %v1574
      %1608 = vmatpush.msra.mxu0 %v1573
      %1609 = vmatmul.f32.gmra.mxu0 %v1541
      %v1610 = vpop.f32.mrf.mxu0
      %v1611 = vadd.f32 %v1591, %v1610
      %1612 = vmatmul.f32.gmra.mxu0 %v1542
      %v1613 = vpop.f32.mrf.mxu0
      %v1614 = vadd.f32 %v1591, %v1613
      %1615 = vmatmul.f32.gmra.mxu0 %v1543
      %v1616 = vpop.f32.mrf.mxu0
      %v1617 = vadd.f32 %v1591, %v1616
      %1618 = vmatmul.f32.gmra.mxu0 %v1544
      %v1619 = vpop.f32.mrf.mxu0
      %v1620 = vadd.f32 %v1591, %v1619
      %1621 = vmatmul.f32.gmra.mxu0 %v1545
      %v1622 = vpop.f32.mrf.mxu0
      %v1623 = vadd.f32 %v1591, %v1622
      %1624 = vmatmul.f32.gmra.mxu0 %v1546
      %v1625 = vpop.f32.mrf.mxu0
      %v1626 = vadd.f32 %v1591, %v1625
      %1627 = vmatmul.f32.gmra.mxu0 %v1547
      %v1628 = vpop.f32.mrf.mxu0
      %v1629 = vadd.f32 %v1591, %v1628
      %1630 = vmatmul.f32.gmra.mxu0 %v1548
      %v1631 = vpop.f32.mrf.mxu0
      %v1632 = vadd.f32 %v1591, %v1631
      %1633 = vmatmul.f32.gmra.mxu0 %v1549
      %v1634 = vpop.f32.mrf.mxu0
      %v1635 = vadd.f32 %v1591, %v1634
      %1636 = vmatmul.f32.gmra.mxu0 %v1550
      %v1637 = vpop.f32.mrf.mxu0
      %v1638 = vadd.f32 %v1591, %v1637
      %1639 = vmatmul.f32.gmra.mxu0 %v1551
      %v1640 = vpop.f32.mrf.mxu0
      %v1641 = vadd.f32 %v1591, %v1640
      %1642 = vmatmul.f32.gmra.mxu0 %v1552
      %v1643 = vpop.f32.mrf.mxu0
      %v1644 = vadd.f32 %v1591, %v1643
      %1645 = vmatmul.f32.gmra.mxu0 %v1553
      %v1646 = vpop.f32.mrf.mxu0
      %v1647 = vadd.f32 %v1591, %v1646
      %1648 = vmatmul.f32.gmra.mxu0 %v1554
      %v1649 = vpop.f32.mrf.mxu0
      %v1650 = vadd.f32 %v1591, %v1649
      %1651 = vmatmul.f32.gmra.mxu0 %v1555
      %v1652 = vpop.f32.mrf.mxu0
      %v1653 = vadd.f32 %v1591, %v1652
      %1654 = vmatmul.f32.gmra.mxu0 %v1556
      %v1655 = vpop.f32.mrf.mxu0
      %v1656 = vadd.f32 %v1591, %v1655
      %1657 = vmatmul.f32.gmra.mxu0 %v1557
      %v1658 = vpop.f32.mrf.mxu0
      %v1659 = vadd.f32 %v1591, %v1658
      %1660 = vmatmul.f32.gmra.mxu0 %v1558
      %v1661 = vpop.f32.mrf.mxu0
      %v1662 = vadd.f32 %v1591, %v1661
      %1663 = vmatmul.f32.gmra.mxu0 %v1559
      %v1664 = vpop.f32.mrf.mxu0
      %v1665 = vadd.f32 %v1591, %v1664
      %1666 = vmatmul.f32.gmra.mxu0 %v1560
      %v1667 = vpop.f32.mrf.mxu0
      %v1668 = vadd.f32 %v1591, %v1667
      %1669 = vmatmul.f32.gmra.mxu0 %v1561
      %v1670 = vpop.f32.mrf.mxu0
      %v1671 = vadd.f32 %v1591, %v1670
      %1672 = vmatmul.f32.gmra.mxu0 %v1562
      %v1673 = vpop.f32.mrf.mxu0
      %v1674 = vadd.f32 %v1591, %v1673
      %1675 = vmatmul.f32.gmra.mxu0 %v1563
      %v1676 = vpop.f32.mrf.mxu0
      %v1677 = vadd.f32 %v1591, %v1676
      %1678 = vmatmul.f32.gmra.mxu0 %v1564
      %v1679 = vpop.f32.mrf.mxu0
      %v1680 = vadd.f32 %v1591, %v1679
      %1681 = vmatmul.f32.gmra.mxu0 %v1565
      %v1682 = vpop.f32.mrf.mxu0
      %v1683 = vadd.f32 %v1591, %v1682
      %1684 = vmatmul.f32.gmra.mxu0 %v1566
      %v1685 = vpop.f32.mrf.mxu0
      %v1686 = vadd.f32 %v1591, %v1685
      %1687 = vmatmul.f32.gmra.mxu0 %v1567
      %v1688 = vpop.f32.mrf.mxu0
      %v1689 = vadd.f32 %v1591, %v1688
      %1690 = vmatmul.f32.gmra.mxu0 %v1568
      %v1691 = vpop.f32.mrf.mxu0
      %v1692 = vadd.f32 %v1591, %v1691
      %1693 = vmatmul.f32.gmra.mxu0 %v1569
      %v1694 = vpop.f32.mrf.mxu0
      %v1695 = vadd.f32 %v1591, %v1694
      %1696 = vmatmul.f32.gmra.mxu0 %v1570
      %v1697 = vpop.f32.mrf.mxu0
      %v1698 = vadd.f32 %v1591, %v1697
      %1699 = vmatmul.f32.gmra.mxu0 %v1571
      %v1700 = vpop.f32.mrf.mxu0
      %v1701 = vadd.f32 %v1591, %v1700
      %1702 = vmatmul.f32.gmra.mxu0 %v1572
      %v1703 = vpop.f32.mrf.mxu0
      %v1704 = vadd.f32 %v1591, %v1703
      %1705 = vdwg.mxu0
      %v1706 = vmax.f32 %v1611, 0.0
      %v1707 = vmax.f32 %v1614, 0.0
      %v1708 = vmax.f32 %v1617, 0.0
      %v1709 = vmax.f32 %v1620, 0.0
      %v1710 = vmax.f32 %v1623, 0.0
      %v1711 = vmax.f32 %v1626, 0.0
      %v1712 = vmax.f32 %v1629, 0.0
      %v1713 = vmax.f32 %v1632, 0.0
      %v1714 = vmax.f32 %v1635, 0.0
      %v1715 = vmax.f32 %v1638, 0.0
      %v1716 = vmax.f32 %v1641, 0.0
      %v1717 = vmax.f32 %v1644, 0.0
      %v1718 = vmax.f32 %v1647, 0.0
      %v1719 = vmax.f32 %v1650, 0.0
      %v1720 = vmax.f32 %v1653, 0.0
      %v1721 = vmax.f32 %v1656, 0.0
      %v1722 = vmax.f32 %v1659, 0.0
      %v1723 = vmax.f32 %v1662, 0.0
      %v1724 = vmax.f32 %v1665, 0.0
      %v1725 = vmax.f32 %v1668, 0.0
      %v1726 = vmax.f32 %v1671, 0.0
      %v1727 = vmax.f32 %v1674, 0.0
      %v1728 = vmax.f32 %v1677, 0.0
      %v1729 = vmax.f32 %v1680, 0.0
      %v1730 = vmax.f32 %v1683, 0.0
      %v1731 = vmax.f32 %v1686, 0.0
      %v1732 = vmax.f32 %v1689, 0.0
      %v1733 = vmax.f32 %v1692, 0.0
      %v1734 = vmax.f32 %v1695, 0.0
      %v1735 = vmax.f32 %v1698, 0.0
      %v1736 = vmax.f32 %v1701, 0.0
      %v1737 = vmax.f32 %v1704, 0.0
      %v1738 = vld [vmem:[%s13] sm:$0xff]
      %v1739 = vld [vmem:[%s13 + $0x8] sm:$0xff]
      %v1740 = vld [vmem:[%s13 + $0x10] sm:$0xff]
      %v1741 = vld [vmem:[%s13 + $0x18] sm:$0xff]
      %v1742 = vld [vmem:[%s13 + $0x20] sm:$0xff]
      %v1743 = vld [vmem:[%s13 + $0x28] sm:$0xff]
      %v1744 = vld [vmem:[%s13 + $0x30] sm:$0xff]
      %v1745 = vld [vmem:[%s13 + $0x38] sm:$0xff]
      %v1746 = vld [vmem:[%s13 + $0x40] sm:$0xff]
      %v1747 = vld [vmem:[%s13 + $0x48] sm:$0xff]
      %v1748 = vld [vmem:[%s13 + $0x50] sm:$0xff]
      %v1749 = vld [vmem:[%s13 + $0x58] sm:$0xff]
      %v1750 = vld [vmem:[%s13 + $0x60] sm:$0xff]
      %v1751 = vld [vmem:[%s13 + $0x68] sm:$0xff]
      %v1752 = vld [vmem:[%s13 + $0x70] sm:$0xff]
      %v1753 = vld [vmem:[%s13 + $0x78] sm:$0xff]
      %v1754 = vld [vmem:[%s14] sm:$0x1]
      %v1756 = vperm.slane %v1754, 0
      %1758 = vmatpush.msra.mxu0 %v1753
      %1759 = vmatpush.msra.mxu0 %v1752
      %1760 = vmatpush.msra.mxu0 %v1751
      %1761 = vmatpush.msra.mxu0 %v1750
      %1762 = vmatpush.msra.mxu0 %v1749
      %1763 = vmatpush.msra.mxu0 %v1748
      %1764 = vmatpush.msra.mxu0 %v1747
      %1765 = vmatpush.msra.mxu0 %v1746
      %1766 = vmatpush.msra.mxu0 %v1745
      %1767 = vmatpush.msra.mxu0 %v1744
      %1768 = vmatpush.msra.mxu0 %v1743
      %1769 = vmatpush.msra.mxu0 %v1742
      %1770 = vmatpush.msra.mxu0 %v1741
      %1771 = vmatpush.msra.mxu0 %v1740
      %1772 = vmatpush.msra.mxu0 %v1739
      %1773 = vmatpush.msra.mxu0 %v1738
      %1774 = vmatmul.f32.gmra.mxu0 %v1706
      %v1775 = vpop.f32.mrf.mxu0
      %v1776 = vadd.f32 %v1756, %v1775
      %1777 = vmatmul.f32.gmra.mxu0 %v1707
      %v1778 = vpop.f32.mrf.mxu0
      %v1779 = vadd.f32 %v1756, %v1778
      %1780 = vmatmul.f32.gmra.mxu0 %v1708
      %v1781 = vpop.f32.mrf.mxu0
      %v1782 = vadd.f32 %v1756, %v1781
      %1783 = vmatmul.f32.gmra.mxu0 %v1709
      %v1784 = vpop.f32.mrf.mxu0
      %v1785 = vadd.f32 %v1756, %v1784
      %1786 = vmatmul.f32.gmra.mxu0 %v1710
      %v1787 = vpop.f32.mrf.mxu0
      %v1788 = vadd.f32 %v1756, %v1787
      %1789 = vmatmul.f32.gmra.mxu0 %v1711
      %v1790 = vpop.f32.mrf.mxu0
      %v1791 = vadd.f32 %v1756, %v1790
      %1792 = vmatmul.f32.gmra.mxu0 %v1712
      %v1793 = vpop.f32.mrf.mxu0
      %v1794 = vadd.f32 %v1756, %v1793
      %1795 = vmatmul.f32.gmra.mxu0 %v1713
      %v1796 = vpop.f32.mrf.mxu0
      %v1797 = vadd.f32 %v1756, %v1796
      %1798 = vmatmul.f32.gmra.mxu0 %v1714
      %v1799 = vpop.f32.mrf.mxu0
      %v1800 = vadd.f32 %v1756, %v1799
      %1801 = vmatmul.f32.gmra.mxu0 %v1715
      %v1802 = vpop.f32.mrf.mxu0
      %v1803 = vadd.f32 %v1756, %v1802
      %1804 = vmatmul.f32.gmra.mxu0 %v1716
      %v1805 = vpop.f32.mrf.mxu0
      %v1806 = vadd.f32 %v1756, %v1805
      %1807 = vmatmul.f32.gmra.mxu0 %v1717
      %v1808 = vpop.f32.mrf.mxu0
      %v1809 = vadd.f32 %v1756, %v1808
      %1810 = vmatmul.f32.gmra.mxu0 %v1718
      %v1811 = vpop.f32.mrf.mxu0
      %v1812 = vadd.f32 %v1756, %v1811
      %1813 = vmatmul.f32.gmra.mxu0 %v1719
      %v1814 = vpop.f32.mrf.mxu0
      %v1815 = vadd.f32 %v1756, %v1814
      %1816 = vmatmul.f32.gmra.mxu0 %v1720
      %v1817 = vpop.f32.mrf.mxu0
      %v1818 = vadd.f32 %v1756, %v1817
      %1819 = vmatmul.f32.gmra.mxu0 %v1721
      %v1820 = vpop.f32.mrf.mxu0
      %v1821 = vadd.f32 %v1756, %v1820
      %1822 = vmatmul.f32.gmra.mxu0 %v1722
      %v1823 = vpop.f32.mrf.mxu0
      %v1824 = vadd.f32 %v1756, %v1823
      %1825 = vmatmul.f32.gmra.mxu0 %v1723
      %v1826 = vpop.f32.mrf.mxu0
      %v1827 = vadd.f32 %v1756, %v1826
      %1828 = vmatmul.f32.gmra.mxu0 %v1724
      %v1829 = vpop.f32.mrf.mxu0
      %v1830 = vadd.f32 %v1756, %v1829
      %1831 = vmatmul.f32.gmra.mxu0 %v1725
      %v1832 = vpop.f32.mrf.mxu0
      %v1833 = vadd.f32 %v1756, %v1832
      %1834 = vmatmul.f32.gmra.mxu0 %v1726
      %v1835 = vpop.f32.mrf.mxu0
      %v1836 = vadd.f32 %v1756, %v1835
      %1837 = vmatmul.f32.gmra.mxu0 %v1727
      %v1838 = vpop.f32.mrf.mxu0
      %v1839 = vadd.f32 %v1756, %v1838
      %1840 = vmatmul.f32.gmra.mxu0 %v1728
      %v1841 = vpop.f32.mrf.mxu0
      %v1842 = vadd.f32 %v1756, %v1841
      %1843 = vmatmul.f32.gmra.mxu0 %v1729
      %v1844 = vpop.f32.mrf.mxu0
      %v1845 = vadd.f32 %v1756, %v1844
      %1846 = vmatmul.f32.gmra.mxu0 %v1730
      %v1847 = vpop.f32.mrf.mxu0
      %v1848 = vadd.f32 %v1756, %v1847
      %1849 = vmatmul.f32.gmra.mxu0 %v1731
      %v1850 = vpop.f32.mrf.mxu0
      %v1851 = vadd.f32 %v1756, %v1850
      %1852 = vmatmul.f32.gmra.mxu0 %v1732
      %v1853 = vpop.f32.mrf.mxu0
      %v1854 = vadd.f32 %v1756, %v1853
      %1855 = vmatmul.f32.gmra.mxu0 %v1733
      %v1856 = vpop.f32.mrf.mxu0
      %v1857 = vadd.f32 %v1756, %v1856
      %1858 = vmatmul.f32.gmra.mxu0 %v1734
      %v1859 = vpop.f32.mrf.mxu0
      %v1860 = vadd.f32 %v1756, %v1859
      %1861 = vmatmul.f32.gmra.mxu0 %v1735
      %v1862 = vpop.f32.mrf.mxu0
      %v1863 = vadd.f32 %v1756, %v1862
      %1864 = vmatmul.f32.gmra.mxu0 %v1736
      %v1865 = vpop.f32.mrf.mxu0
      %v1866 = vadd.f32 %v1756, %v1865
      %1867 = vmatmul.f32.gmra.mxu0 %v1737
      %v1868 = vpop.f32.mrf.mxu0
      %v1869 = vadd.f32 %v1756, %v1868
      %1870 = vdwg.mxu0
      %v1871 = vmax.f32 %v1776, 0.0
      %v1872 = vmax.f32 %v1779, 0.0
      %v1873 = vmax.f32 %v1782, 0.0
      %v1874 = vmax.f32 %v1785, 0.0
      %v1875 = vmax.f32 %v1788, 0.0
      %v1876 = vmax.f32 %v1791, 0.0
      %v1877 = vmax.f32 %v1794, 0.0
      %v1878 = vmax.f32 %v1797, 0.0
      %v1879 = vmax.f32 %v1800, 0.0
      %v1880 = vmax.f32 %v1803, 0.0
      %v1881 = vmax.f32 %v1806, 0.0
      %v1882 = vmax.f32 %v1809, 0.0
      %v1883 = vmax.f32 %v1812, 0.0
      %v1884 = vmax.f32 %v1815, 0.0
      %v1885 = vmax.f32 %v1818, 0.0
      %v1886 = vmax.f32 %v1821, 0.0
      %v1887 = vmax.f32 %v1824, 0.0
      %v1888 = vmax.f32 %v1827, 0.0
      %v1889 = vmax.f32 %v1830, 0.0
      %v1890 = vmax.f32 %v1833, 0.0
      %v1891 = vmax.f32 %v1836, 0.0
      %v1892 = vmax.f32 %v1839, 0.0
      %v1893 = vmax.f32 %v1842, 0.0
      %v1894 = vmax.f32 %v1845, 0.0
      %v1895 = vmax.f32 %v1848, 0.0
      %v1896 = vmax.f32 %v1851, 0.0
      %v1897 = vmax.f32 %v1854, 0.0
      %v1898 = vmax.f32 %v1857, 0.0
      %v1899 = vmax.f32 %v1860, 0.0
      %v1900 = vmax.f32 %v1863, 0.0
      %v1901 = vmax.f32 %v1866, 0.0
      %v1902 = vmax.f32 %v1869, 0.0
      %v1903 = vld [vmem:[%s15] sm:$0xff]
      %v1904 = vld [vmem:[%s15 + $0x8] sm:$0xff]
      %v1905 = vld [vmem:[%s15 + $0x10] sm:$0xff]
      %v1906 = vld [vmem:[%s15 + $0x18] sm:$0xff]
      %v1907 = vld [vmem:[%s15 + $0x20] sm:$0xff]
      %v1908 = vld [vmem:[%s15 + $0x28] sm:$0xff]
      %v1909 = vld [vmem:[%s15 + $0x30] sm:$0xff]
      %v1910 = vld [vmem:[%s15 + $0x38] sm:$0xff]
      %v1911 = vld [vmem:[%s15 + $0x40] sm:$0xff]
      %v1912 = vld [vmem:[%s15 + $0x48] sm:$0xff]
      %v1913 = vld [vmem:[%s15 + $0x50] sm:$0xff]
      %v1914 = vld [vmem:[%s15 + $0x58] sm:$0xff]
      %v1915 = vld [vmem:[%s15 + $0x60] sm:$0xff]
      %v1916 = vld [vmem:[%s15 + $0x68] sm:$0xff]
      %v1917 = vld [vmem:[%s15 + $0x70] sm:$0xff]
      %v1918 = vld [vmem:[%s15 + $0x78] sm:$0xff]
      %v1919 = vld [vmem:[%s16] sm:$0x1]
      %v1921 = vperm.slane %v1919, 0
      %1923 = vmatpush.msra.mxu0 %v1918
      %1924 = vmatpush.msra.mxu0 %v1917
      %1925 = vmatpush.msra.mxu0 %v1916
      %1926 = vmatpush.msra.mxu0 %v1915
      %1927 = vmatpush.msra.mxu0 %v1914
      %1928 = vmatpush.msra.mxu0 %v1913
      %1929 = vmatpush.msra.mxu0 %v1912
      %1930 = vmatpush.msra.mxu0 %v1911
      %1931 = vmatpush.msra.mxu0 %v1910
      %1932 = vmatpush.msra.mxu0 %v1909
      %1933 = vmatpush.msra.mxu0 %v1908
      %1934 = vmatpush.msra.mxu0 %v1907
      %1935 = vmatpush.msra.mxu0 %v1906
      %1936 = vmatpush.msra.mxu0 %v1905
      %1937 = vmatpush.msra.mxu0 %v1904
      %1938 = vmatpush.msra.mxu0 %v1903
      %1939 = vmatmul.f32.gmra.mxu0 %v1871
      %v1940 = vpop.f32.mrf.mxu0
      %v1941 = vadd.f32 %v1921, %v1940
      %1942 = vmatmul.f32.gmra.mxu0 %v1872
      %v1943 = vpop.f32.mrf.mxu0
      %v1944 = vadd.f32 %v1921, %v1943
      %1945 = vmatmul.f32.gmra.mxu0 %v1873
      %v1946 = vpop.f32.mrf.mxu0
      %v1947 = vadd.f32 %v1921, %v1946
      %1948 = vmatmul.f32.gmra.mxu0 %v1874
      %v1949 = vpop.f32.mrf.mxu0
      %v1950 = vadd.f32 %v1921, %v1949
      %1951 = vmatmul.f32.gmra.mxu0 %v1875
      %v1952 = vpop.f32.mrf.mxu0
      %v1953 = vadd.f32 %v1921, %v1952
      %1954 = vmatmul.f32.gmra.mxu0 %v1876
      %v1955 = vpop.f32.mrf.mxu0
      %v1956 = vadd.f32 %v1921, %v1955
      %1957 = vmatmul.f32.gmra.mxu0 %v1877
      %v1958 = vpop.f32.mrf.mxu0
      %v1959 = vadd.f32 %v1921, %v1958
      %1960 = vmatmul.f32.gmra.mxu0 %v1878
      %v1961 = vpop.f32.mrf.mxu0
      %v1962 = vadd.f32 %v1921, %v1961
      %1963 = vmatmul.f32.gmra.mxu0 %v1879
      %v1964 = vpop.f32.mrf.mxu0
      %v1965 = vadd.f32 %v1921, %v1964
      %1966 = vmatmul.f32.gmra.mxu0 %v1880
      %v1967 = vpop.f32.mrf.mxu0
      %v1968 = vadd.f32 %v1921, %v1967
      %1969 = vmatmul.f32.gmra.mxu0 %v1881
      %v1970 = vpop.f32.mrf.mxu0
      %v1971 = vadd.f32 %v1921, %v1970
      %1972 = vmatmul.f32.gmra.mxu0 %v1882
      %v1973 = vpop.f32.mrf.mxu0
      %v1974 = vadd.f32 %v1921, %v1973
      %1975 = vmatmul.f32.gmra.mxu0 %v1883
      %v1976 = vpop.f32.mrf.mxu0
      %v1977 = vadd.f32 %v1921, %v1976
      %1978 = vmatmul.f32.gmra.mxu0 %v1884
      %v1979 = vpop.f32.mrf.mxu0
      %v1980 = vadd.f32 %v1921, %v1979
      %1981 = vmatmul.f32.gmra.mxu0 %v1885
      %v1982 = vpop.f32.mrf.mxu0
      %v1983 = vadd.f32 %v1921, %v1982
      %1984 = vmatmul.f32.gmra.mxu0 %v1886
      %v1985 = vpop.f32.mrf.mxu0
      %v1986 = vadd.f32 %v1921, %v1985
      %1987 = vmatmul.f32.gmra.mxu0 %v1887
      %v1988 = vpop.f32.mrf.mxu0
      %v1989 = vadd.f32 %v1921, %v1988
      %1990 = vmatmul.f32.gmra.mxu0 %v1888
      %v1991 = vpop.f32.mrf.mxu0
      %v1992 = vadd.f32 %v1921, %v1991
      %1993 = vmatmul.f32.gmra.mxu0 %v1889
      %v1994 = vpop.f32.mrf.mxu0
      %v1995 = vadd.f32 %v1921, %v1994
      %1996 = vmatmul.f32.gmra.mxu0 %v1890
      %v1997 = vpop.f32.mrf.mxu0
      %v1998 = vadd.f32 %v1921, %v1997
      %1999 = vmatmul.f32.gmra.mxu0 %v1891
      %v2000 = vpop.f32.mrf.mxu0
      %v2001 = vadd.f32 %v1921, %v2000
      %2002 = vmatmul.f32.gmra.mxu0 %v1892
      %v2003 = vpop.f32.mrf.mxu0
      %v2004 = vadd.f32 %v1921, %v2003
      %2005 = vmatmul.f32.gmra.mxu0 %v1893
      %v2006 = vpop.f32.mrf.mxu0
      %v2007 = vadd.f32 %v1921, %v2006
      %2008 = vmatmul.f32.gmra.mxu0 %v1894
      %v2009 = vpop.f32.mrf.mxu0
      %v2010 = vadd.f32 %v1921, %v2009
      %2011 = vmatmul.f32.gmra.mxu0 %v1895
      %v2012 = vpop.f32.mrf.mxu0
      %v2013 = vadd.f32 %v1921, %v2012
      %2014 = vmatmul.f32.gmra.mxu0 %v1896
      %v2015 = vpop.f32.mrf.mxu0
      %v2016 = vadd.f32 %v1921, %v2015
      %2017 = vmatmul.f32.gmra.mxu0 %v1897
      %v2018 = vpop.f32.mrf.mxu0
      %v2019 = vadd.f32 %v1921, %v2018
      %2020 = vmatmul.f32.gmra.mxu0 %v1898
      %v2021 = vpop.f32.mrf.mxu0
      %v2022 = vadd.f32 %v1921, %v2021
      %2023 = vmatmul.f32.gmra.mxu0 %v1899
      %v2024 = vpop.f32.mrf.mxu0
      %v2025 = vadd.f32 %v1921, %v2024
      %2026 = vmatmul.f32.gmra.mxu0 %v1900
      %v2027 = vpop.f32.mrf.mxu0
      %v2028 = vadd.f32 %v1921, %v2027
      %2029 = vmatmul.f32.gmra.mxu0 %v1901
      %v2030 = vpop.f32.mrf.mxu0
      %v2031 = vadd.f32 %v1921, %v2030
      %2032 = vmatmul.f32.gmra.mxu0 %v1902
      %v2033 = vpop.f32.mrf.mxu0
      %v2034 = vadd.f32 %v1921, %v2033
      %2035 = vdwg.mxu0
      %2036 = vst [vmem:[%s553] sm:$0xff] %v1941
      %2037 = vst [vmem:[%s553 + $0x8] sm:$0xff] %v1944
      %2038 = vst [vmem:[%s553 + $0x10] sm:$0xff] %v1947
      %2039 = vst [vmem:[%s553 + $0x18] sm:$0xff] %v1950
      %2040 = vst [vmem:[%s553 + $0x20] sm:$0xff] %v1953
      %2041 = vst [vmem:[%s553 + $0x28] sm:$0xff] %v1956
      %2042 = vst [vmem:[%s553 + $0x30] sm:$0xff] %v1959
      %2043 = vst [vmem:[%s553 + $0x38] sm:$0xff] %v1962
      %2044 = vst [vmem:[%s553 + $0x40] sm:$0xff] %v1965
      %2045 = vst [vmem:[%s553 + $0x48] sm:$0xff] %v1968
      %2046 = vst [vmem:[%s553 + $0x50] sm:$0xff] %v1971
      %2047 = vst [vmem:[%s553 + $0x58] sm:$0xff] %v1974
      %2048 = vst [vmem:[%s553 + $0x60] sm:$0xff] %v1977
      %2049 = vst [vmem:[%s553 + $0x68] sm:$0xff] %v1980
      %2050 = vst [vmem:[%s553 + $0x70] sm:$0xff] %v1983
      %2051 = vst [vmem:[%s553 + $0x78] sm:$0xff] %v1986
      %2052 = vst [vmem:[%s553 + $0x80] sm:$0xff] %v1989
      %2053 = vst [vmem:[%s553 + $0x88] sm:$0xff] %v1992
      %2054 = vst [vmem:[%s553 + $0x90] sm:$0xff] %v1995
      %2055 = vst [vmem:[%s553 + $0x98] sm:$0xff] %v1998
      %2056 = vst [vmem:[%s553 + $0xa0] sm:$0xff] %v2001
      %2057 = vst [vmem:[%s553 + $0xa8] sm:$0xff] %v2004
      %2058 = vst [vmem:[%s553 + $0xb0] sm:$0xff] %v2007
      %2059 = vst [vmem:[%s553 + $0xb8] sm:$0xff] %v2010
      %2060 = vst [vmem:[%s553 + $0xc0] sm:$0xff] %v2013
      %2061 = vst [vmem:[%s553 + $0xc8] sm:$0xff] %v2016
      %2062 = vst [vmem:[%s553 + $0xd0] sm:$0xff] %v2019
      %2063 = vst [vmem:[%s553 + $0xd8] sm:$0xff] %v2022
      %2064 = vst [vmem:[%s553 + $0xe0] sm:$0xff] %v2025
      %2065 = vst [vmem:[%s553 + $0xe8] sm:$0xff] %v2028
      %2066 = vst [vmem:[%s553 + $0xf0] sm:$0xff] %v2031
      %2067 = vst [vmem:[%s553 + $0xf8] sm:$0xff] %v2034
      %s2068 = smul.u32 32, %s28
      %p2069 = scmp.lt.s32.totalorder %s2068, 63
      %s2070 = scalar_select %p2069, %s2068, 63
      %s2071 = smul.addr %s2070, 8
      %s2072 = scalar_lea.vmem %s17, %s2071
      // Predicated region
      $region89: #{spherical_harmonics_mlp.1} parent=87 // pred_check
        %p2073 = pneg %p408
      $region90: #{spherical_harmonics_mlp.1} parent=87 // pred_check_branch
        %2075 = sbr.rel (%p2073) target = $region92
      $region91: #{spherical_harmonics_mlp.1} parent=87 // pred_region
        %s2076 = smul.u32 32, %s28
      $region92: #{spherical_harmonics_mlp.1} parent=87 // pred_fallthru
        _
    $region88: #{spherical_harmonics_mlp.1} parent=5 // pred_fallthru
      _
    %p2077 = scmp.le.s32.totalorder 2, %s23
    // Predicated region
    $region93: #{spherical_harmonics_mlp.1} parent=5 // pred_check
      %p2078 = pneg %p2077
    $region94: #{spherical_harmonics_mlp.1} parent=5 // pred_check_branch
      %2080 = sbr.rel (%p2078) target = $region96
    $region95: #{spherical_harmonics_mlp.1} parent=5 // pred_region
      %s2081 = ssub.s32 %s23, 2
      // Predicated region
      $region97: #{spherical_harmonics_mlp.1} parent=95 // pred_check
        %p2082 = pneg %p414
      $region98: #{spherical_harmonics_mlp.1} parent=95 // pred_check_branch
        %2084 = sbr.rel (%p2082) target = $region100
      $region99: #{spherical_harmonics_mlp.1} parent=95 // pred_region
        %s2085 = smul.u32 32, %s29
        %p2086 = scmp.lt.s32.totalorder %s2085, 63
        %s2087 = scalar_select %p2086, %s2085, 63
        %s2088 = smul.addr %s2087, 8
        %s2089 = scalar_lea.vmem %s17, %s2088
      $region100: #{spherical_harmonics_mlp.1} parent=95 // pred_fallthru
        _
    $region96: #{spherical_harmonics_mlp.1} parent=5 // pred_fallthru
      _
  $region6: #{spherical_harmonics_mlp.1} parent=0 // loop_footer
    %s27 = sadd.s32 1, %s23
  $region7: #{spherical_harmonics_mlp.1} parent=0 // loop_footer_branch
    %22 = sbr.rel target = $region3
  $region8: #{spherical_harmonics_mlp.1} parent=0 // loop_exit
    _

</llo_original>
